<compile_context>
chip_gen: v6e
topology: v6e:2x2x1
jax: 0.10.0
libtpu: 0.0.40
codegen_flags: <defaults>
</compile_context>

<pallas_src>
import functools

import numpy as np
import jax
import jax.numpy as jnp
from jax.experimental import pallas as pl
from jax.experimental.pallas import tpu as pltpu


# ----------------------------------------------------------------------------
# binomial coefficients (same as the PyTorch helper)
# ----------------------------------------------------------------------------
def binomial_coeff(alpha: float, j: int) -> float:
    if j < 0:
        return 0.0
    coeff = 1.0
    for i in range(j):
        coeff *= (alpha - i) / (i + 1)
    return coeff


def make_binom_coeffs(alpha: float, window: int) -> np.ndarray:
    return np.array(
        [(-1.0) ** j * binomial_coeff(alpha, j) for j in range(window + 1)],
        dtype=np.float32,
    )


# ----------------------------------------------------------------------------
# Pallas kernel
# ----------------------------------------------------------------------------
def _fsmm_kernel(
    x2d_ref,                    # (T*B, D) time-major flattened input
    w0t_ref,                    # (D, 4H)   layer-0 input weights  [i,f,o,g]
    u0t_ref,                    # (H, 4H)   layer-0 hidden weights [i,f,o,g]
    wu1_ref,                    # (2H, 4H)  layer-1 [W1t ; U1t] fused
    consts_ref,                 # (4, 4H)   packed biases / head weights / window consts
    vtc_ref,                    # (B, 3T)   [voltage | time | current]
    hs_ref,                     # (2T, 2T)  block-diag [hist_mat, 0; 0, start_mat]
    scal_ref,                   # SMEM (4,) [fc_b, fs2_b, R1, C1]
    up_ref,                     # out (B, T)
    misc_ref,                   # out (B, 3) [soc, d_soc, f_soc]
    *, B, T, H, alpha,
):
    f32 = jnp.float32
    D = x2d_ref.shape[1]

    w0t = w0t_ref[...]
    u0t = u0t_ref[...]
    wu1 = wu1_ref[...]
    consts = consts_ref[...]

    b0 = consts[0:1, :]                       # (1, 4H)
    b1 = consts[1:2, :]                       # (1, 4H)
    fcw = consts[2:3, 0:H]                    # (1, H)
    fs1w = consts[2:3, H:2 * H]               # (1, H)
    fs1b = consts[2:3, 2 * H:3 * H]           # (1, H)
    fs2w = consts[2:3, 3 * H:4 * H]           # (1, H)
    inv_denom = consts[3:4, 0:T]              # (1, T)
    single_add = consts[3:4, T:2 * T]         # (1, T)

    fcb = scal_ref[0]
    fs2b = scal_ref[1]
    r1 = scal_ref[2]
    c1p = scal_ref[3]

    # Hoisted layer-0 input projection: one MXU call covering every time step.
    x_proj = jnp.dot(x2d_ref[...], w0t, preferred_element_type=f32) + b0   # (T*B,4H)

    def gates(a):
        # gate column order is [i, f, o, g]; sigmoid(x) = 0.5*(tanh(x/2)+1)
        s = 0.5 * (jnp.tanh(0.5 * a[:, 0:3 * H]) + 1.0)
        g = jnp.tanh(a[:, 3 * H:4 * H])
        return s[:, 0:H], s[:, H:2 * H], s[:, 2 * H:3 * H], g

    def lstm_step(a, cprev):
        i, f, o, g = gates(a)
        cn = f * cprev + i * g
        tc = jnp.tanh(cn)
        return o * tc, cn, (i, f, o, g), tc

    def cell_jvp(da, gts, cprev, tc):
        # forward-mode tangent through one LSTM cell (dh_prev = dc_prev = 0)
        i, f, o, g = gts
        di = i * (1.0 - i) * da[:, 0:H]
        df = f * (1.0 - f) * da[:, H:2 * H]
        do = o * (1.0 - o) * da[:, 2 * H:3 * H]
        dg = (1.0 - g * g) * da[:, 3 * H:4 * H]
        dc = df * cprev + di * g + i * dg
        return do * tc + o * (1.0 - tc * tc) * dc

    h0 = jnp.zeros((B, H), f32)
    c0 = jnp.zeros((B, H), f32)
    h1 = jnp.zeros((B, H), f32)
    c1 = jnp.zeros((B, H), f32)
    dsoc = jnp.zeros((B, 1), f32)

    # TODO(synk): switch to lax.fori_loop with the last step peeled if T grows.
    for t in range(T):                               # T small & static -> unroll
        a0 = x_proj[t * B:(t + 1) * B, :] + jnp.dot(
            h0, u0t, preferred_element_type=f32)
        h0n, c0n, g0, tc0 = lstm_step(a0, c0)

        hcat = jnp.concatenate([h0n, h1], axis=1)    # (B, 2H)
        a1 = jnp.dot(hcat, wu1, preferred_element_type=f32) + b1
        h1n, c1n, g1, tc1 = lstm_step(a1, c1)

        if t == T - 1:
            # tangent seeded with one-hot at x[:, T-1, D-1]
            da0 = w0t[D - 1:D, :]                    # (1, 4H), broadcasts over B
            dh0 = cell_jvp(da0, g0, c0, tc0)
            da1 = jnp.dot(dh0, wu1[0:H, :], preferred_element_type=f32)
            dh1 = cell_jvp(da1, g1, c1, tc1)
            dsoc = jnp.sum(dh1 * fcw, axis=-1, keepdims=True)

        h0, c0, h1, c1 = h0n, c0n, h1n, c1n

    soc = jnp.sum(h1 * fcw, axis=-1, keepdims=True) + fcb           # (B, 1)

    # f_soc = f_f_soc2(f_f_soc1(soc))
    hsoc = soc * fs1w + fs1b                                        # (B, H)
    fsoc = jnp.sum(hsoc * fs2w, axis=-1, keepdims=True) + fs2b      # (B, 1)

    # ---- Up sequence (fractional-memory window as a single matmul) ----
    vtc = vtc_ref[...]                        # (B, 3T) = [voltage | time | current]
    volt = vtc[:, 0:T]
    tvec = vtc[:, T:2 * T]
    curr = vtc[:, 2 * T:3 * T]
    hs = jnp.dot(vtc[:, 0:2 * T], hs_ref[...], preferred_element_type=f32)  # (B,2T)
    hist = hs[:, 0:T]                          # sliding-window binomial history
    tstart = hs[:, T:2 * T]                    # time at window start
    tdiff = (tvec - tstart) * inv_denom + single_add
    if alpha == 0.5:
        tsa = jnp.sqrt(tdiff)                  # torch pow semantics: neg->nan, 0->0
    else:
        safe = jnp.where(tdiff > 0.0, tdiff, 1.0)
        tsa = jnp.where(tdiff > 0.0,
                        jnp.exp(alpha * jnp.log(safe)),
                        jnp.where(tdiff == 0.0, 0.0, jnp.nan))
    inv_rc = 1.0 / (r1 * c1p)
    inv_c = 1.0 / c1p
    up_ref[...] = tsa * (curr * inv_c - volt * inv_rc) - hist

    misc_ref[:, 0:1] = soc
    misc_ref[:, 1:2] = dsoc
    misc_ref[:, 2:3] = fsoc


# ----------------------------------------------------------------------------
# Wrapper (parameter packing + broadcasting glue)
# ----------------------------------------------------------------------------
def _perm_gates(w):
    """Permute the PyTorch gate order [i,f,g,o] (leading 4H axis) -> [i,f,o,g]."""
    i, f, g, o = jnp.split(jnp.asarray(w, jnp.float32), 4, axis=0)
    return jnp.concatenate([i, f, o, g], axis=0)


def fsmm_lstm_forward(x, p, *, window=10, alpha=0.5):
    B, T, D = x.shape
    H = p["w_hh0"].shape[1]
    assert 2 * T <= 4 * H, "constant packing assumes 2*T <= 4*H"
    binom = make_binom_coeffs(alpha, window)

    # constant matrices implementing the sliding-window history / start gather
    hist_mat = np.zeros((T, T), np.float32)
    start_mat = np.zeros((T, T), np.float32)
    inv_denom = np.zeros((T,), np.float32)
    single_add = np.zeros((T,), np.float32)
    for t in range(T):
        start = max(0, t - window + 1)
        valid = t + 1 - start
        start_mat[start, t] = 1.0
        if valid > 1:
            inv_denom[t] = 1.0 / float(valid - 1)
        else:
            single_add[t] = 1.0
        for s in range(T):
            d = t - s
            if 0 <= d <= window - 1:
                hist_mat[s, t] = binom[window - d]
    hs_mat = np.zeros((2 * T, 2 * T), np.float32)   # block-diag: one fused matmul
    hs_mat[:T, :T] = hist_mat
    hs_mat[T:, T:] = start_mat

    # LSTM weights: gate-permuted, transposed; layer-1 W/U vertically fused
    w0t = _perm_gates(p["w_ih0"]).T                        # (D, 4H)
    u0t = _perm_gates(p["w_hh0"]).T                        # (H, 4H)
    w1t = _perm_gates(p["w_ih1"]).T                        # (H, 4H)
    u1t = _perm_gates(p["w_hh1"]).T                        # (H, 4H)
    wu1 = jnp.concatenate([w1t, u1t], axis=0)              # (2H, 4H)
    b0 = _perm_gates(p["b_ih0"] + p["b_hh0"])              # (4H,)
    b1 = _perm_gates(p["b_ih1"] + p["b_hh1"])              # (4H,)

    # packed small constants: 4 rows x 4H lanes (one DMA instead of ten)
    consts = jnp.zeros((4, 4 * H), jnp.float32)
    consts = consts.at[0, :].set(b0)
    consts = consts.at[1, :].set(b1)
    consts = consts.at[2, 0:H].set(jnp.asarray(p["fc_w"], jnp.float32).reshape(H))
    consts = consts.at[2, H:2 * H].set(jnp.asarray(p["fs1_w"], jnp.float32).reshape(H))
    consts = consts.at[2, 2 * H:3 * H].set(jnp.asarray(p["fs1_b"], jnp.float32).reshape(H))
    consts = consts.at[2, 3 * H:4 * H].set(jnp.asarray(p["fs2_w"], jnp.float32).reshape(H))
    consts = consts.at[3, 0:T].set(jnp.asarray(inv_denom))
    consts = consts.at[3, T:2 * T].set(jnp.asarray(single_add))

    scal = jnp.stack([
        jnp.asarray(p["fc_b"], jnp.float32).reshape(()),
        jnp.asarray(p["fs2_b"], jnp.float32).reshape(()),
        jnp.asarray(p["R1"], jnp.float32).reshape(()),
        jnp.asarray(p["C1"], jnp.float32).reshape(()),
    ])

    x = jnp.asarray(x, jnp.float32)
    x2d = jnp.transpose(x, (1, 0, 2)).reshape(T * B, D)          # time-major rows
    vtc = jnp.concatenate([x[:, :, 0], x[:, :, 3], x[:, :, 1]], axis=1)   # (B, 3T)

    vmem = pl.BlockSpec(memory_space=pltpu.MemorySpace.VMEM)
    smem = pl.BlockSpec(memory_space=pltpu.MemorySpace.SMEM)
    up, misc = pl.pallas_call(
        functools.partial(_fsmm_kernel, B=B, T=T, H=H, alpha=alpha),
        out_shape=(
            jax.ShapeDtypeStruct((B, T), jnp.float32),   # Up sequence
            jax.ShapeDtypeStruct((B, 3), jnp.float32),   # [soc, d_soc, f_soc]
        ),
        in_specs=[vmem, vmem, vmem, vmem, vmem, vmem, vmem, smem],
        out_specs=(vmem, vmem),
    )(x2d, w0t, u0t, wu1, consts, vtc, jnp.asarray(hs_mat), scal)

    soc = misc[:, 0:1]
    dsoc = misc[:, 1]
    fsoc = misc[:, 2:3]

    # broadcasting glue -- reproduces PyTorch (B,1) + (B,) -> (B,B)
    lamada = p["delta"] / p["Q"] * x[:, -1, 1:2]
    loss1 = lamada + dsoc
    loss2 = fsoc - x[:, -1, 0:1] - p["R0"] * x[:, -1, 1:2] - up[:, -1]
    return soc, loss1, loss2


# ----------------------------------------------------------------------------
# Deterministic parameter initialization (synthetic, matches module shapes)
# ----------------------------------------------------------------------------
def init_params(key, input_size, hidden_size):
    H, D = hidden_size, input_size
    k = 1.0 / np.sqrt(H)
    keys = jax.random.split(key, 14)

    def u(kk, shape):
        return jax.random.uniform(kk, shape, jnp.float32, -k, k)

    return {
        "w_ih0": u(keys[0], (4 * H, D)),
        "w_hh0": u(keys[1], (4 * H, H)),
        "b_ih0": u(keys[2], (4 * H,)),
        "b_hh0": u(keys[3], (4 * H,)),
        "w_ih1": u(keys[4], (4 * H, H)),
        "w_hh1": u(keys[5], (4 * H, H)),
        "b_ih1": u(keys[6], (4 * H,)),
        "b_hh1": u(keys[7], (4 * H,)),
        "fc_w": u(keys[8], (1, H)),
        "fc_b": u(keys[9], (1,)),
        "fs1_w": u(keys[10], (H, 1)),
        "fs1_b": u(keys[11], (H,)),
        "fs2_w": u(keys[12], (1, H)),
        "fs2_b": u(keys[13], (1,)),
        "Q": 2.9, "delta": 1.0, "U0": 1.0, "R0": 1.0, "C1": 1.0, "R1": 1.0,
    }


# ----------------------------------------------------------------------------
# Pure-JAX reference (uses jax.grad for d_soc) for a correctness check
# ----------------------------------------------------------------------------
def _ref_lstm_soc(x, p):
    B, T, D = x.shape
    H = p["w_hh0"].shape[1]

    def cell(xt, h, c, wih, whh, bih, bhh):
        a = xt @ wih.T + h @ whh.T + bih + bhh
        i = jax.nn.sigmoid(a[:, :H])
        f = jax.nn.sigmoid(a[:, H:2 * H])
        g = jnp.tanh(a[:, 2 * H:3 * H])
        o = jax.nn.sigmoid(a[:, 3 * H:])
        c = f * c + i * g
        return o * jnp.tanh(c), c

    h0 = c0 = h1 = c1 = jnp.zeros((B, H), jnp.float32)
    for t in range(T):
        h0, c0 = cell(x[:, t], h0, c0, p["w_ih0"], p["w_hh0"], p["b_ih0"], p["b_hh0"])
        h1, c1 = cell(h0, h1, c1, p["w_ih1"], p["w_hh1"], p["b_ih1"], p["b_hh1"])
    return h1 @ p["fc_w"].T + p["fc_b"]


def _ref_forward(x, p, window, alpha, binom):
    B, T, D = x.shape
    soc = _ref_lstm_soc(x, p)
    g = jax.grad(lambda xx: jnp.sum(_ref_lstm_soc(xx, p)))(x)
    d_soc = g[:, -1, -1]
    lamada = p["delta"] / p["Q"] * x[:, -1, 1:2]
    loss1 = lamada + d_soc
    f_soc = (soc @ p["fs1_w"].T + p["fs1_b"]) @ p["fs2_w"].T + p["fs2_b"]

    voltage = x[:, :, 0]
    time = x[:, :, 3]
    up = []
    for t in range(T):
        start = max(0, t - window + 1)
        valid = t + 1 - start
        pad = window - valid
        padded = jnp.concatenate(
            [jnp.zeros((B, pad), jnp.float32), voltage[:, start:t + 1]], axis=1)
        if valid > 1:
            tdiff = (time[:, t] - time[:, start]) / (valid - 1)
        else:
            tdiff = jnp.ones((B,), jnp.float32)
        tsa = tdiff ** alpha
        a = -tsa / (p["R1"] * p["C1"])
        b = tsa / p["C1"] * x[:, t, 1]
        hist = padded @ binom[1:window + 1]
        up.append(a * voltage[:, t] + b - hist)
    up = jnp.stack(up, axis=1)
    loss2 = f_soc - x[:, -1, 0:1] - p["R0"] * x[:, -1, 1:2] - up[:, -1]
    return soc, loss1, loss2


# ----------------------------------------------------------------------------
if __name__ == "__main__":
    B, T, D, H = 2, 8, 4, 32
    window, alpha = 10, 0.5

    key = jax.random.PRNGKey(0)
    kx, kt, kp = jax.random.split(key, 3)
    feat = jax.random.normal(kx, (B, T, D), jnp.float32) * 0.5
    dt = jax.random.uniform(kt, (B, T), jnp.float32, 0.5, 1.5)
    x = feat.at[:, :, 3].set(jnp.cumsum(dt, axis=1))   # positive, increasing time

    params = init_params(kp, D, H)

    soc, loss1, loss2 = fsmm_lstm_forward(x, params, window=window, alpha=alpha)
    jax.block_until_ready((soc, loss1, loss2))

    # correctness check against pure-JAX reference
    binom = jnp.asarray(make_binom_coeffs(alpha, window))
    soc_r, loss1_r, loss2_r = _ref_forward(x, params, window, alpha, binom)
    np.testing.assert_allclose(np.asarray(soc), np.asarray(soc_r), rtol=1e-2, atol=1e-3)
    np.testing.assert_allclose(np.asarray(loss1), np.asarray(loss1_r), rtol=1e-2, atol=1e-3)
    np.testing.assert_allclose(np.asarray(loss2), np.asarray(loss2_r), rtol=1e-2, atol=1e-3)

    print("KERNEL_OK")
</pallas_src>

<mosaic_0001>
module attributes {stable_mosaic.version = 11 : i64} {
  func.func @_fsmm_kernel(%arg0: memref<16x4xf32, #tpu.memory_space<vmem>>, %arg1: memref<4x128xf32, #tpu.memory_space<vmem>>, %arg2: memref<32x128xf32, #tpu.memory_space<vmem>>, %arg3: memref<64x128xf32, #tpu.memory_space<vmem>>, %arg4: memref<4x128xf32, #tpu.memory_space<vmem>>, %arg5: memref<2x24xf32, #tpu.memory_space<vmem>>, %arg6: memref<16x16xf32, #tpu.memory_space<vmem>>, %arg7: memref<4xf32, #tpu.memory_space<smem>>, %arg8: memref<2x8xf32, #tpu.memory_space<vmem>>, %arg9: memref<2x3xf32, #tpu.memory_space<vmem>>) attributes {dimension_semantics = [], scalar_prefetch = 0 : i64, scratch_operands = 0 : i64, tpu.core_type = #tpu.core_type<tc>} {
    %c0 = arith.constant 0 : index
    %c0_0 = arith.constant 0 : index
    %0 = vector.load %arg1[%c0, %c0_0] : memref<4x128xf32, #tpu.memory_space<vmem>>, vector<4x128xf32>
    %c0_1 = arith.constant 0 : index
    %c0_2 = arith.constant 0 : index
    %1 = vector.load %arg2[%c0_1, %c0_2] : memref<32x128xf32, #tpu.memory_space<vmem>>, vector<32x128xf32>
    %c0_3 = arith.constant 0 : index
    %c0_4 = arith.constant 0 : index
    %2 = vector.load %arg3[%c0_3, %c0_4] : memref<64x128xf32, #tpu.memory_space<vmem>>, vector<64x128xf32>
    %c0_5 = arith.constant 0 : index
    %c0_6 = arith.constant 0 : index
    %3 = vector.load %arg4[%c0_5, %c0_6] : memref<4x128xf32, #tpu.memory_space<vmem>>, vector<4x128xf32>
    %4 = vector.extract_strided_slice %3 {offsets = [0, 0], sizes = [1, 128], strides = [1, 1]} : vector<4x128xf32> to vector<1x128xf32>
    %5 = vector.extract_strided_slice %3 {offsets = [1, 0], sizes = [1, 128], strides = [1, 1]} : vector<4x128xf32> to vector<1x128xf32>
    %6 = vector.extract_strided_slice %3 {offsets = [2, 0], sizes = [1, 32], strides = [1, 1]} : vector<4x128xf32> to vector<1x32xf32>
    %7 = vector.extract_strided_slice %3 {offsets = [2, 32], sizes = [1, 32], strides = [1, 1]} : vector<4x128xf32> to vector<1x32xf32>
    %8 = vector.extract_strided_slice %3 {offsets = [2, 64], sizes = [1, 32], strides = [1, 1]} : vector<4x128xf32> to vector<1x32xf32>
    %9 = vector.extract_strided_slice %3 {offsets = [2, 96], sizes = [1, 32], strides = [1, 1]} : vector<4x128xf32> to vector<1x32xf32>
    %10 = vector.extract_strided_slice %3 {offsets = [3, 0], sizes = [1, 8], strides = [1, 1]} : vector<4x128xf32> to vector<1x8xf32>
    %11 = vector.extract_strided_slice %3 {offsets = [3, 8], sizes = [1, 8], strides = [1, 1]} : vector<4x128xf32> to vector<1x8xf32>
    %c0_7 = arith.constant 0 : index
    %12 = memref.load %arg7[%c0_7] : memref<4xf32, #tpu.memory_space<smem>>
    %c1 = arith.constant 1 : index
    %13 = memref.load %arg7[%c1] : memref<4xf32, #tpu.memory_space<smem>>
    %c2 = arith.constant 2 : index
    %14 = memref.load %arg7[%c2] : memref<4xf32, #tpu.memory_space<smem>>
    %c3 = arith.constant 3 : index
    %15 = memref.load %arg7[%c3] : memref<4xf32, #tpu.memory_space<smem>>
    %c0_8 = arith.constant 0 : index
    %c0_9 = arith.constant 0 : index
    %16 = vector.load %arg0[%c0_8, %c0_9] : memref<16x4xf32, #tpu.memory_space<vmem>>, vector<16x4xf32>
    %cst = arith.constant dense<0.000000e+00> : vector<16x128xf32>
    %17 = tpu.matmul %16, %0, %cst {dimension_numbers = #tpu.dot_dimension_numbers<[1], [0], [0], [1], [0, 0, 1, 1], [], []>} : vector<16x4xf32>, vector<4x128xf32>, vector<16x128xf32> -> vector<16x128xf32>
    %18 = vector.broadcast %4 : vector<1x128xf32> to vector<16x128xf32>
    %19 = arith.addf %17, %18 : vector<16x128xf32>
    %cst_10 = arith.constant 0.000000e+00 : f32
    %20 = vector.broadcast %cst_10 : f32 to vector<2x32xf32>
    %cst_11 = arith.constant 0.000000e+00 : f32
    %21 = vector.broadcast %cst_11 : f32 to vector<2x32xf32>
    %cst_12 = arith.constant 0.000000e+00 : f32
    %22 = vector.broadcast %cst_12 : f32 to vector<2x32xf32>
    %cst_13 = arith.constant 0.000000e+00 : f32
    %23 = vector.broadcast %cst_13 : f32 to vector<2x32xf32>
    %24 = vector.extract_strided_slice %19 {offsets = [0, 0], sizes = [2, 128], strides = [1, 1]} : vector<16x128xf32> to vector<2x128xf32>
    %cst_14 = arith.constant dense<0.000000e+00> : vector<2x128xf32>
    %25 = tpu.matmul %20, %1, %cst_14 {dimension_numbers = #tpu.dot_dimension_numbers<[1], [0], [0], [1], [0, 0, 1, 1], [], []>} : vector<2x32xf32>, vector<32x128xf32>, vector<2x128xf32> -> vector<2x128xf32>
    %26 = arith.addf %24, %25 : vector<2x128xf32>
    %27 = vector.extract_strided_slice %26 {offsets = [0, 0], sizes = [2, 96], strides = [1, 1]} : vector<2x128xf32> to vector<2x96xf32>
    %cst_15 = arith.constant 5.000000e-01 : f32
    %28 = vector.broadcast %cst_15 : f32 to vector<2x96xf32>
    %29 = arith.mulf %28, %27 : vector<2x96xf32>
    %30 = math.tanh %29 : vector<2x96xf32>
    %cst_16 = arith.constant 1.000000e+00 : f32
    %31 = vector.broadcast %cst_16 : f32 to vector<2x96xf32>
    %32 = arith.addf %30, %31 : vector<2x96xf32>
    %cst_17 = arith.constant 5.000000e-01 : f32
    %33 = vector.broadcast %cst_17 : f32 to vector<2x96xf32>
    %34 = arith.mulf %33, %32 : vector<2x96xf32>
    %35 = vector.extract_strided_slice %26 {offsets = [0, 96], sizes = [2, 32], strides = [1, 1]} : vector<2x128xf32> to vector<2x32xf32>
    %36 = math.tanh %35 : vector<2x32xf32>
    %37 = vector.extract_strided_slice %34 {offsets = [0, 0], sizes = [2, 32], strides = [1, 1]} : vector<2x96xf32> to vector<2x32xf32>
    %38 = vector.extract_strided_slice %34 {offsets = [0, 32], sizes = [2, 32], strides = [1, 1]} : vector<2x96xf32> to vector<2x32xf32>
    %39 = vector.extract_strided_slice %34 {offsets = [0, 64], sizes = [2, 32], strides = [1, 1]} : vector<2x96xf32> to vector<2x32xf32>
    %40 = arith.mulf %38, %21 : vector<2x32xf32>
    %41 = arith.mulf %37, %36 : vector<2x32xf32>
    %42 = arith.addf %40, %41 : vector<2x32xf32>
    %43 = math.tanh %42 : vector<2x32xf32>
    %44 = arith.mulf %39, %43 : vector<2x32xf32>
    %45 = tpu.concatenate %44, %22 in 1 : vector<2x32xf32>, vector<2x32xf32> -> vector<2x64xf32>
    %cst_18 = arith.constant dense<0.000000e+00> : vector<2x128xf32>
    %46 = tpu.matmul %45, %2, %cst_18 {dimension_numbers = #tpu.dot_dimension_numbers<[1], [0], [0], [1], [0, 0, 1, 1], [], []>} : vector<2x64xf32>, vector<64x128xf32>, vector<2x128xf32> -> vector<2x128xf32>
    %47 = vector.broadcast %5 : vector<1x128xf32> to vector<2x128xf32>
    %48 = arith.addf %46, %47 : vector<2x128xf32>
    %49 = vector.extract_strided_slice %48 {offsets = [0, 0], sizes = [2, 96], strides = [1, 1]} : vector<2x128xf32> to vector<2x96xf32>
    %cst_19 = arith.constant 5.000000e-01 : f32
    %50 = vector.broadcast %cst_19 : f32 to vector<2x96xf32>
    %51 = arith.mulf %50, %49 : vector<2x96xf32>
    %52 = math.tanh %51 : vector<2x96xf32>
    %cst_20 = arith.constant 1.000000e+00 : f32
    %53 = vector.broadcast %cst_20 : f32 to vector<2x96xf32>
    %54 = arith.addf %52, %53 : vector<2x96xf32>
    %cst_21 = arith.constant 5.000000e-01 : f32
    %55 = vector.broadcast %cst_21 : f32 to vector<2x96xf32>
    %56 = arith.mulf %55, %54 : vector<2x96xf32>
    %57 = vector.extract_strided_slice %48 {offsets = [0, 96], sizes = [2, 32], strides = [1, 1]} : vector<2x128xf32> to vector<2x32xf32>
    %58 = math.tanh %57 : vector<2x32xf32>
    %59 = vector.extract_strided_slice %56 {offsets = [0, 0], sizes = [2, 32], strides = [1, 1]} : vector<2x96xf32> to vector<2x32xf32>
    %60 = vector.extract_strided_slice %56 {offsets = [0, 32], sizes = [2, 32], strides = [1, 1]} : vector<2x96xf32> to vector<2x32xf32>
    %61 = vector.extract_strided_slice %56 {offsets = [0, 64], sizes = [2, 32], strides = [1, 1]} : vector<2x96xf32> to vector<2x32xf32>
    %62 = arith.mulf %60, %23 : vector<2x32xf32>
    %63 = arith.mulf %59, %58 : vector<2x32xf32>
    %64 = arith.addf %62, %63 : vector<2x32xf32>
    %65 = math.tanh %64 : vector<2x32xf32>
    %66 = arith.mulf %61, %65 : vector<2x32xf32>
    %67 = vector.extract_strided_slice %19 {offsets = [2, 0], sizes = [2, 128], strides = [1, 1]} : vector<16x128xf32> to vector<2x128xf32>
    %cst_22 = arith.constant dense<0.000000e+00> : vector<2x128xf32>
    %68 = tpu.matmul %44, %1, %cst_22 {dimension_numbers = #tpu.dot_dimension_numbers<[1], [0], [0], [1], [0, 0, 1, 1], [], []>} : vector<2x32xf32>, vector<32x128xf32>, vector<2x128xf32> -> vector<2x128xf32>
    %69 = arith.addf %67, %68 : vector<2x128xf32>
    %70 = vector.extract_strided_slice %69 {offsets = [0, 0], sizes = [2, 96], strides = [1, 1]} : vector<2x128xf32> to vector<2x96xf32>
    %cst_23 = arith.constant 5.000000e-01 : f32
    %71 = vector.broadcast %cst_23 : f32 to vector<2x96xf32>
    %72 = arith.mulf %71, %70 : vector<2x96xf32>
    %73 = math.tanh %72 : vector<2x96xf32>
    %cst_24 = arith.constant 1.000000e+00 : f32
    %74 = vector.broadcast %cst_24 : f32 to vector<2x96xf32>
    %75 = arith.addf %73, %74 : vector<2x96xf32>
    %cst_25 = arith.constant 5.000000e-01 : f32
    %76 = vector.broadcast %cst_25 : f32 to vector<2x96xf32>
    %77 = arith.mulf %76, %75 : vector<2x96xf32>
    %78 = vector.extract_strided_slice %69 {offsets = [0, 96], sizes = [2, 32], strides = [1, 1]} : vector<2x128xf32> to vector<2x32xf32>
    %79 = math.tanh %78 : vector<2x32xf32>
    %80 = vector.extract_strided_slice %77 {offsets = [0, 0], sizes = [2, 32], strides = [1, 1]} : vector<2x96xf32> to vector<2x32xf32>
    %81 = vector.extract_strided_slice %77 {offsets = [0, 32], sizes = [2, 32], strides = [1, 1]} : vector<2x96xf32> to vector<2x32xf32>
    %82 = vector.extract_strided_slice %77 {offsets = [0, 64], sizes = [2, 32], strides = [1, 1]} : vector<2x96xf32> to vector<2x32xf32>
    %83 = arith.mulf %81, %42 : vector<2x32xf32>
    %84 = arith.mulf %80, %79 : vector<2x32xf32>
    %85 = arith.addf %83, %84 : vector<2x32xf32>
    %86 = math.tanh %85 : vector<2x32xf32>
    %87 = arith.mulf %82, %86 : vector<2x32xf32>
    %88 = tpu.concatenate %87, %66 in 1 : vector<2x32xf32>, vector<2x32xf32> -> vector<2x64xf32>
    %cst_26 = arith.constant dense<0.000000e+00> : vector<2x128xf32>
    %89 = tpu.matmul %88, %2, %cst_26 {dimension_numbers = #tpu.dot_dimension_numbers<[1], [0], [0], [1], [0, 0, 1, 1], [], []>} : vector<2x64xf32>, vector<64x128xf32>, vector<2x128xf32> -> vector<2x128xf32>
    %90 = vector.broadcast %5 : vector<1x128xf32> to vector<2x128xf32>
    %91 = arith.addf %89, %90 : vector<2x128xf32>
    %92 = vector.extract_strided_slice %91 {offsets = [0, 0], sizes = [2, 96], strides = [1, 1]} : vector<2x128xf32> to vector<2x96xf32>
    %cst_27 = arith.constant 5.000000e-01 : f32
    %93 = vector.broadcast %cst_27 : f32 to vector<2x96xf32>
    %94 = arith.mulf %93, %92 : vector<2x96xf32>
    %95 = math.tanh %94 : vector<2x96xf32>
    %cst_28 = arith.constant 1.000000e+00 : f32
    %96 = vector.broadcast %cst_28 : f32 to vector<2x96xf32>
    %97 = arith.addf %95, %96 : vector<2x96xf32>
    %cst_29 = arith.constant 5.000000e-01 : f32
    %98 = vector.broadcast %cst_29 : f32 to vector<2x96xf32>
    %99 = arith.mulf %98, %97 : vector<2x96xf32>
    %100 = vector.extract_strided_slice %91 {offsets = [0, 96], sizes = [2, 32], strides = [1, 1]} : vector<2x128xf32> to vector<2x32xf32>
    %101 = math.tanh %100 : vector<2x32xf32>
    %102 = vector.extract_strided_slice %99 {offsets = [0, 0], sizes = [2, 32], strides = [1, 1]} : vector<2x96xf32> to vector<2x32xf32>
    %103 = vector.extract_strided_slice %99 {offsets = [0, 32], sizes = [2, 32], strides = [1, 1]} : vector<2x96xf32> to vector<2x32xf32>
    %104 = vector.extract_strided_slice %99 {offsets = [0, 64], sizes = [2, 32], strides = [1, 1]} : vector<2x96xf32> to vector<2x32xf32>
    %105 = arith.mulf %103, %64 : vector<2x32xf32>
    %106 = arith.mulf %102, %101 : vector<2x32xf32>
    %107 = arith.addf %105, %106 : vector<2x32xf32>
    %108 = math.tanh %107 : vector<2x32xf32>
    %109 = arith.mulf %104, %108 : vector<2x32xf32>
    %110 = vector.extract_strided_slice %19 {offsets = [4, 0], sizes = [2, 128], strides = [1, 1]} : vector<16x128xf32> to vector<2x128xf32>
    %cst_30 = arith.constant dense<0.000000e+00> : vector<2x128xf32>
    %111 = tpu.matmul %87, %1, %cst_30 {dimension_numbers = #tpu.dot_dimension_numbers<[1], [0], [0], [1], [0, 0, 1, 1], [], []>} : vector<2x32xf32>, vector<32x128xf32>, vector<2x128xf32> -> vector<2x128xf32>
    %112 = arith.addf %110, %111 : vector<2x128xf32>
    %113 = vector.extract_strided_slice %112 {offsets = [0, 0], sizes = [2, 96], strides = [1, 1]} : vector<2x128xf32> to vector<2x96xf32>
    %cst_31 = arith.constant 5.000000e-01 : f32
    %114 = vector.broadcast %cst_31 : f32 to vector<2x96xf32>
    %115 = arith.mulf %114, %113 : vector<2x96xf32>
    %116 = math.tanh %115 : vector<2x96xf32>
    %cst_32 = arith.constant 1.000000e+00 : f32
    %117 = vector.broadcast %cst_32 : f32 to vector<2x96xf32>
    %118 = arith.addf %116, %117 : vector<2x96xf32>
    %cst_33 = arith.constant 5.000000e-01 : f32
    %119 = vector.broadcast %cst_33 : f32 to vector<2x96xf32>
    %120 = arith.mulf %119, %118 : vector<2x96xf32>
    %121 = vector.extract_strided_slice %112 {offsets = [0, 96], sizes = [2, 32], strides = [1, 1]} : vector<2x128xf32> to vector<2x32xf32>
    %122 = math.tanh %121 : vector<2x32xf32>
    %123 = vector.extract_strided_slice %120 {offsets = [0, 0], sizes = [2, 32], strides = [1, 1]} : vector<2x96xf32> to vector<2x32xf32>
    %124 = vector.extract_strided_slice %120 {offsets = [0, 32], sizes = [2, 32], strides = [1, 1]} : vector<2x96xf32> to vector<2x32xf32>
    %125 = vector.extract_strided_slice %120 {offsets = [0, 64], sizes = [2, 32], strides = [1, 1]} : vector<2x96xf32> to vector<2x32xf32>
    %126 = arith.mulf %124, %85 : vector<2x32xf32>
    %127 = arith.mulf %123, %122 : vector<2x32xf32>
    %128 = arith.addf %126, %127 : vector<2x32xf32>
    %129 = math.tanh %128 : vector<2x32xf32>
    %130 = arith.mulf %125, %129 : vector<2x32xf32>
    %131 = tpu.concatenate %130, %109 in 1 : vector<2x32xf32>, vector<2x32xf32> -> vector<2x64xf32>
    %cst_34 = arith.constant dense<0.000000e+00> : vector<2x128xf32>
    %132 = tpu.matmul %131, %2, %cst_34 {dimension_numbers = #tpu.dot_dimension_numbers<[1], [0], [0], [1], [0, 0, 1, 1], [], []>} : vector<2x64xf32>, vector<64x128xf32>, vector<2x128xf32> -> vector<2x128xf32>
    %133 = vector.broadcast %5 : vector<1x128xf32> to vector<2x128xf32>
    %134 = arith.addf %132, %133 : vector<2x128xf32>
    %135 = vector.extract_strided_slice %134 {offsets = [0, 0], sizes = [2, 96], strides = [1, 1]} : vector<2x128xf32> to vector<2x96xf32>
    %cst_35 = arith.constant 5.000000e-01 : f32
    %136 = vector.broadcast %cst_35 : f32 to vector<2x96xf32>
    %137 = arith.mulf %136, %135 : vector<2x96xf32>
    %138 = math.tanh %137 : vector<2x96xf32>
    %cst_36 = arith.constant 1.000000e+00 : f32
    %139 = vector.broadcast %cst_36 : f32 to vector<2x96xf32>
    %140 = arith.addf %138, %139 : vector<2x96xf32>
    %cst_37 = arith.constant 5.000000e-01 : f32
    %141 = vector.broadcast %cst_37 : f32 to vector<2x96xf32>
    %142 = arith.mulf %141, %140 : vector<2x96xf32>
    %143 = vector.extract_strided_slice %134 {offsets = [0, 96], sizes = [2, 32], strides = [1, 1]} : vector<2x128xf32> to vector<2x32xf32>
    %144 = math.tanh %143 : vector<2x32xf32>
    %145 = vector.extract_strided_slice %142 {offsets = [0, 0], sizes = [2, 32], strides = [1, 1]} : vector<2x96xf32> to vector<2x32xf32>
    %146 = vector.extract_strided_slice %142 {offsets = [0, 32], sizes = [2, 32], strides = [1, 1]} : vector<2x96xf32> to vector<2x32xf32>
    %147 = vector.extract_strided_slice %142 {offsets = [0, 64], sizes = [2, 32], strides = [1, 1]} : vector<2x96xf32> to vector<2x32xf32>
    %148 = arith.mulf %146, %107 : vector<2x32xf32>
    %149 = arith.mulf %145, %144 : vector<2x32xf32>
    %150 = arith.addf %148, %149 : vector<2x32xf32>
    %151 = math.tanh %150 : vector<2x32xf32>
    %152 = arith.mulf %147, %151 : vector<2x32xf32>
    %153 = vector.extract_strided_slice %19 {offsets = [6, 0], sizes = [2, 128], strides = [1, 1]} : vector<16x128xf32> to vector<2x128xf32>
    %cst_38 = arith.constant dense<0.000000e+00> : vector<2x128xf32>
    %154 = tpu.matmul %130, %1, %cst_38 {dimension_numbers = #tpu.dot_dimension_numbers<[1], [0], [0], [1], [0, 0, 1, 1], [], []>} : vector<2x32xf32>, vector<32x128xf32>, vector<2x128xf32> -> vector<2x128xf32>
    %155 = arith.addf %153, %154 : vector<2x128xf32>
    %156 = vector.extract_strided_slice %155 {offsets = [0, 0], sizes = [2, 96], strides = [1, 1]} : vector<2x128xf32> to vector<2x96xf32>
    %cst_39 = arith.constant 5.000000e-01 : f32
    %157 = vector.broadcast %cst_39 : f32 to vector<2x96xf32>
    %158 = arith.mulf %157, %156 : vector<2x96xf32>
    %159 = math.tanh %158 : vector<2x96xf32>
    %cst_40 = arith.constant 1.000000e+00 : f32
    %160 = vector.broadcast %cst_40 : f32 to vector<2x96xf32>
    %161 = arith.addf %159, %160 : vector<2x96xf32>
    %cst_41 = arith.constant 5.000000e-01 : f32
    %162 = vector.broadcast %cst_41 : f32 to vector<2x96xf32>
    %163 = arith.mulf %162, %161 : vector<2x96xf32>
    %164 = vector.extract_strided_slice %155 {offsets = [0, 96], sizes = [2, 32], strides = [1, 1]} : vector<2x128xf32> to vector<2x32xf32>
    %165 = math.tanh %164 : vector<2x32xf32>
    %166 = vector.extract_strided_slice %163 {offsets = [0, 0], sizes = [2, 32], strides = [1, 1]} : vector<2x96xf32> to vector<2x32xf32>
    %167 = vector.extract_strided_slice %163 {offsets = [0, 32], sizes = [2, 32], strides = [1, 1]} : vector<2x96xf32> to vector<2x32xf32>
    %168 = vector.extract_strided_slice %163 {offsets = [0, 64], sizes = [2, 32], strides = [1, 1]} : vector<2x96xf32> to vector<2x32xf32>
    %169 = arith.mulf %167, %128 : vector<2x32xf32>
    %170 = arith.mulf %166, %165 : vector<2x32xf32>
    %171 = arith.addf %169, %170 : vector<2x32xf32>
    %172 = math.tanh %171 : vector<2x32xf32>
    %173 = arith.mulf %168, %172 : vector<2x32xf32>
    %174 = tpu.concatenate %173, %152 in 1 : vector<2x32xf32>, vector<2x32xf32> -> vector<2x64xf32>
    %cst_42 = arith.constant dense<0.000000e+00> : vector<2x128xf32>
    %175 = tpu.matmul %174, %2, %cst_42 {dimension_numbers = #tpu.dot_dimension_numbers<[1], [0], [0], [1], [0, 0, 1, 1], [], []>} : vector<2x64xf32>, vector<64x128xf32>, vector<2x128xf32> -> vector<2x128xf32>
    %176 = vector.broadcast %5 : vector<1x128xf32> to vector<2x128xf32>
    %177 = arith.addf %175, %176 : vector<2x128xf32>
    %178 = vector.extract_strided_slice %177 {offsets = [0, 0], sizes = [2, 96], strides = [1, 1]} : vector<2x128xf32> to vector<2x96xf32>
    %cst_43 = arith.constant 5.000000e-01 : f32
    %179 = vector.broadcast %cst_43 : f32 to vector<2x96xf32>
    %180 = arith.mulf %179, %178 : vector<2x96xf32>
    %181 = math.tanh %180 : vector<2x96xf32>
    %cst_44 = arith.constant 1.000000e+00 : f32
    %182 = vector.broadcast %cst_44 : f32 to vector<2x96xf32>
    %183 = arith.addf %181, %182 : vector<2x96xf32>
    %cst_45 = arith.constant 5.000000e-01 : f32
    %184 = vector.broadcast %cst_45 : f32 to vector<2x96xf32>
    %185 = arith.mulf %184, %183 : vector<2x96xf32>
    %186 = vector.extract_strided_slice %177 {offsets = [0, 96], sizes = [2, 32], strides = [1, 1]} : vector<2x128xf32> to vector<2x32xf32>
    %187 = math.tanh %186 : vector<2x32xf32>
    %188 = vector.extract_strided_slice %185 {offsets = [0, 0], sizes = [2, 32], strides = [1, 1]} : vector<2x96xf32> to vector<2x32xf32>
    %189 = vector.extract_strided_slice %185 {offsets = [0, 32], sizes = [2, 32], strides = [1, 1]} : vector<2x96xf32> to vector<2x32xf32>
    %190 = vector.extract_strided_slice %185 {offsets = [0, 64], sizes = [2, 32], strides = [1, 1]} : vector<2x96xf32> to vector<2x32xf32>
    %191 = arith.mulf %189, %150 : vector<2x32xf32>
    %192 = arith.mulf %188, %187 : vector<2x32xf32>
    %193 = arith.addf %191, %192 : vector<2x32xf32>
    %194 = math.tanh %193 : vector<2x32xf32>
    %195 = arith.mulf %190, %194 : vector<2x32xf32>
    %196 = vector.extract_strided_slice %19 {offsets = [8, 0], sizes = [2, 128], strides = [1, 1]} : vector<16x128xf32> to vector<2x128xf32>
    %cst_46 = arith.constant dense<0.000000e+00> : vector<2x128xf32>
    %197 = tpu.matmul %173, %1, %cst_46 {dimension_numbers = #tpu.dot_dimension_numbers<[1], [0], [0], [1], [0, 0, 1, 1], [], []>} : vector<2x32xf32>, vector<32x128xf32>, vector<2x128xf32> -> vector<2x128xf32>
    %198 = arith.addf %196, %197 : vector<2x128xf32>
    %199 = vector.extract_strided_slice %198 {offsets = [0, 0], sizes = [2, 96], strides = [1, 1]} : vector<2x128xf32> to vector<2x96xf32>
    %cst_47 = arith.constant 5.000000e-01 : f32
    %200 = vector.broadcast %cst_47 : f32 to vector<2x96xf32>
    %201 = arith.mulf %200, %199 : vector<2x96xf32>
    %202 = math.tanh %201 : vector<2x96xf32>
    %cst_48 = arith.constant 1.000000e+00 : f32
    %203 = vector.broadcast %cst_48 : f32 to vector<2x96xf32>
    %204 = arith.addf %202, %203 : vector<2x96xf32>
    %cst_49 = arith.constant 5.000000e-01 : f32
    %205 = vector.broadcast %cst_49 : f32 to vector<2x96xf32>
    %206 = arith.mulf %205, %204 : vector<2x96xf32>
    %207 = vector.extract_strided_slice %198 {offsets = [0, 96], sizes = [2, 32], strides = [1, 1]} : vector<2x128xf32> to vector<2x32xf32>
    %208 = math.tanh %207 : vector<2x32xf32>
    %209 = vector.extract_strided_slice %206 {offsets = [0, 0], sizes = [2, 32], strides = [1, 1]} : vector<2x96xf32> to vector<2x32xf32>
    %210 = vector.extract_strided_slice %206 {offsets = [0, 32], sizes = [2, 32], strides = [1, 1]} : vector<2x96xf32> to vector<2x32xf32>
    %211 = vector.extract_strided_slice %206 {offsets = [0, 64], sizes = [2, 32], strides = [1, 1]} : vector<2x96xf32> to vector<2x32xf32>
    %212 = arith.mulf %210, %171 : vector<2x32xf32>
    %213 = arith.mulf %209, %208 : vector<2x32xf32>
    %214 = arith.addf %212, %213 : vector<2x32xf32>
    %215 = math.tanh %214 : vector<2x32xf32>
    %216 = arith.mulf %211, %215 : vector<2x32xf32>
    %217 = tpu.concatenate %216, %195 in 1 : vector<2x32xf32>, vector<2x32xf32> -> vector<2x64xf32>
    %cst_50 = arith.constant dense<0.000000e+00> : vector<2x128xf32>
    %218 = tpu.matmul %217, %2, %cst_50 {dimension_numbers = #tpu.dot_dimension_numbers<[1], [0], [0], [1], [0, 0, 1, 1], [], []>} : vector<2x64xf32>, vector<64x128xf32>, vector<2x128xf32> -> vector<2x128xf32>
    %219 = vector.broadcast %5 : vector<1x128xf32> to vector<2x128xf32>
    %220 = arith.addf %218, %219 : vector<2x128xf32>
    %221 = vector.extract_strided_slice %220 {offsets = [0, 0], sizes = [2, 96], strides = [1, 1]} : vector<2x128xf32> to vector<2x96xf32>
    %cst_51 = arith.constant 5.000000e-01 : f32
    %222 = vector.broadcast %cst_51 : f32 to vector<2x96xf32>
    %223 = arith.mulf %222, %221 : vector<2x96xf32>
    %224 = math.tanh %223 : vector<2x96xf32>
    %cst_52 = arith.constant 1.000000e+00 : f32
    %225 = vector.broadcast %cst_52 : f32 to vector<2x96xf32>
    %226 = arith.addf %224, %225 : vector<2x96xf32>
    %cst_53 = arith.constant 5.000000e-01 : f32
    %227 = vector.broadcast %cst_53 : f32 to vector<2x96xf32>
    %228 = arith.mulf %227, %226 : vector<2x96xf32>
    %229 = vector.extract_strided_slice %220 {offsets = [0, 96], sizes = [2, 32], strides = [1, 1]} : vector<2x128xf32> to vector<2x32xf32>
    %230 = math.tanh %229 : vector<2x32xf32>
    %231 = vector.extract_strided_slice %228 {offsets = [0, 0], sizes = [2, 32], strides = [1, 1]} : vector<2x96xf32> to vector<2x32xf32>
    %232 = vector.extract_strided_slice %228 {offsets = [0, 32], sizes = [2, 32], strides = [1, 1]} : vector<2x96xf32> to vector<2x32xf32>
    %233 = vector.extract_strided_slice %228 {offsets = [0, 64], sizes = [2, 32], strides = [1, 1]} : vector<2x96xf32> to vector<2x32xf32>
    %234 = arith.mulf %232, %193 : vector<2x32xf32>
    %235 = arith.mulf %231, %230 : vector<2x32xf32>
    %236 = arith.addf %234, %235 : vector<2x32xf32>
    %237 = math.tanh %236 : vector<2x32xf32>
    %238 = arith.mulf %233, %237 : vector<2x32xf32>
    %239 = vector.extract_strided_slice %19 {offsets = [10, 0], sizes = [2, 128], strides = [1, 1]} : vector<16x128xf32> to vector<2x128xf32>
    %cst_54 = arith.constant dense<0.000000e+00> : vector<2x128xf32>
    %240 = tpu.matmul %216, %1, %cst_54 {dimension_numbers = #tpu.dot_dimension_numbers<[1], [0], [0], [1], [0, 0, 1, 1], [], []>} : vector<2x32xf32>, vector<32x128xf32>, vector<2x128xf32> -> vector<2x128xf32>
    %241 = arith.addf %239, %240 : vector<2x128xf32>
    %242 = vector.extract_strided_slice %241 {offsets = [0, 0], sizes = [2, 96], strides = [1, 1]} : vector<2x128xf32> to vector<2x96xf32>
    %cst_55 = arith.constant 5.000000e-01 : f32
    %243 = vector.broadcast %cst_55 : f32 to vector<2x96xf32>
    %244 = arith.mulf %243, %242 : vector<2x96xf32>
    %245 = math.tanh %244 : vector<2x96xf32>
    %cst_56 = arith.constant 1.000000e+00 : f32
    %246 = vector.broadcast %cst_56 : f32 to vector<2x96xf32>
    %247 = arith.addf %245, %246 : vector<2x96xf32>
    %cst_57 = arith.constant 5.000000e-01 : f32
    %248 = vector.broadcast %cst_57 : f32 to vector<2x96xf32>
    %249 = arith.mulf %248, %247 : vector<2x96xf32>
    %250 = vector.extract_strided_slice %241 {offsets = [0, 96], sizes = [2, 32], strides = [1, 1]} : vector<2x128xf32> to vector<2x32xf32>
    %251 = math.tanh %250 : vector<2x32xf32>
    %252 = vector.extract_strided_slice %249 {offsets = [0, 0], sizes = [2, 32], strides = [1, 1]} : vector<2x96xf32> to vector<2x32xf32>
    %253 = vector.extract_strided_slice %249 {offsets = [0, 32], sizes = [2, 32], strides = [1, 1]} : vector<2x96xf32> to vector<2x32xf32>
    %254 = vector.extract_strided_slice %249 {offsets = [0, 64], sizes = [2, 32], strides = [1, 1]} : vector<2x96xf32> to vector<2x32xf32>
    %255 = arith.mulf %253, %214 : vector<2x32xf32>
    %256 = arith.mulf %252, %251 : vector<2x32xf32>
    %257 = arith.addf %255, %256 : vector<2x32xf32>
    %258 = math.tanh %257 : vector<2x32xf32>
    %259 = arith.mulf %254, %258 : vector<2x32xf32>
    %260 = tpu.concatenate %259, %238 in 1 : vector<2x32xf32>, vector<2x32xf32> -> vector<2x64xf32>
    %cst_58 = arith.constant dense<0.000000e+00> : vector<2x128xf32>
    %261 = tpu.matmul %260, %2, %cst_58 {dimension_numbers = #tpu.dot_dimension_numbers<[1], [0], [0], [1], [0, 0, 1, 1], [], []>} : vector<2x64xf32>, vector<64x128xf32>, vector<2x128xf32> -> vector<2x128xf32>
    %262 = vector.broadcast %5 : vector<1x128xf32> to vector<2x128xf32>
    %263 = arith.addf %261, %262 : vector<2x128xf32>
    %264 = vector.extract_strided_slice %263 {offsets = [0, 0], sizes = [2, 96], strides = [1, 1]} : vector<2x128xf32> to vector<2x96xf32>
    %cst_59 = arith.constant 5.000000e-01 : f32
    %265 = vector.broadcast %cst_59 : f32 to vector<2x96xf32>
    %266 = arith.mulf %265, %264 : vector<2x96xf32>
    %267 = math.tanh %266 : vector<2x96xf32>
    %cst_60 = arith.constant 1.000000e+00 : f32
    %268 = vector.broadcast %cst_60 : f32 to vector<2x96xf32>
    %269 = arith.addf %267, %268 : vector<2x96xf32>
    %cst_61 = arith.constant 5.000000e-01 : f32
    %270 = vector.broadcast %cst_61 : f32 to vector<2x96xf32>
    %271 = arith.mulf %270, %269 : vector<2x96xf32>
    %272 = vector.extract_strided_slice %263 {offsets = [0, 96], sizes = [2, 32], strides = [1, 1]} : vector<2x128xf32> to vector<2x32xf32>
    %273 = math.tanh %272 : vector<2x32xf32>
    %274 = vector.extract_strided_slice %271 {offsets = [0, 0], sizes = [2, 32], strides = [1, 1]} : vector<2x96xf32> to vector<2x32xf32>
    %275 = vector.extract_strided_slice %271 {offsets = [0, 32], sizes = [2, 32], strides = [1, 1]} : vector<2x96xf32> to vector<2x32xf32>
    %276 = vector.extract_strided_slice %271 {offsets = [0, 64], sizes = [2, 32], strides = [1, 1]} : vector<2x96xf32> to vector<2x32xf32>
    %277 = arith.mulf %275, %236 : vector<2x32xf32>
    %278 = arith.mulf %274, %273 : vector<2x32xf32>
    %279 = arith.addf %277, %278 : vector<2x32xf32>
    %280 = math.tanh %279 : vector<2x32xf32>
    %281 = arith.mulf %276, %280 : vector<2x32xf32>
    %282 = vector.extract_strided_slice %19 {offsets = [12, 0], sizes = [2, 128], strides = [1, 1]} : vector<16x128xf32> to vector<2x128xf32>
    %cst_62 = arith.constant dense<0.000000e+00> : vector<2x128xf32>
    %283 = tpu.matmul %259, %1, %cst_62 {dimension_numbers = #tpu.dot_dimension_numbers<[1], [0], [0], [1], [0, 0, 1, 1], [], []>} : vector<2x32xf32>, vector<32x128xf32>, vector<2x128xf32> -> vector<2x128xf32>
    %284 = arith.addf %282, %283 : vector<2x128xf32>
    %285 = vector.extract_strided_slice %284 {offsets = [0, 0], sizes = [2, 96], strides = [1, 1]} : vector<2x128xf32> to vector<2x96xf32>
    %cst_63 = arith.constant 5.000000e-01 : f32
    %286 = vector.broadcast %cst_63 : f32 to vector<2x96xf32>
    %287 = arith.mulf %286, %285 : vector<2x96xf32>
    %288 = math.tanh %287 : vector<2x96xf32>
    %cst_64 = arith.constant 1.000000e+00 : f32
    %289 = vector.broadcast %cst_64 : f32 to vector<2x96xf32>
    %290 = arith.addf %288, %289 : vector<2x96xf32>
    %cst_65 = arith.constant 5.000000e-01 : f32
    %291 = vector.broadcast %cst_65 : f32 to vector<2x96xf32>
    %292 = arith.mulf %291, %290 : vector<2x96xf32>
    %293 = vector.extract_strided_slice %284 {offsets = [0, 96], sizes = [2, 32], strides = [1, 1]} : vector<2x128xf32> to vector<2x32xf32>
    %294 = math.tanh %293 : vector<2x32xf32>
    %295 = vector.extract_strided_slice %292 {offsets = [0, 0], sizes = [2, 32], strides = [1, 1]} : vector<2x96xf32> to vector<2x32xf32>
    %296 = vector.extract_strided_slice %292 {offsets = [0, 32], sizes = [2, 32], strides = [1, 1]} : vector<2x96xf32> to vector<2x32xf32>
    %297 = vector.extract_strided_slice %292 {offsets = [0, 64], sizes = [2, 32], strides = [1, 1]} : vector<2x96xf32> to vector<2x32xf32>
    %298 = arith.mulf %296, %257 : vector<2x32xf32>
    %299 = arith.mulf %295, %294 : vector<2x32xf32>
    %300 = arith.addf %298, %299 : vector<2x32xf32>
    %301 = math.tanh %300 : vector<2x32xf32>
    %302 = arith.mulf %297, %301 : vector<2x32xf32>
    %303 = tpu.concatenate %302, %281 in 1 : vector<2x32xf32>, vector<2x32xf32> -> vector<2x64xf32>
    %cst_66 = arith.constant dense<0.000000e+00> : vector<2x128xf32>
    %304 = tpu.matmul %303, %2, %cst_66 {dimension_numbers = #tpu.dot_dimension_numbers<[1], [0], [0], [1], [0, 0, 1, 1], [], []>} : vector<2x64xf32>, vector<64x128xf32>, vector<2x128xf32> -> vector<2x128xf32>
    %305 = vector.broadcast %5 : vector<1x128xf32> to vector<2x128xf32>
    %306 = arith.addf %304, %305 : vector<2x128xf32>
    %307 = vector.extract_strided_slice %306 {offsets = [0, 0], sizes = [2, 96], strides = [1, 1]} : vector<2x128xf32> to vector<2x96xf32>
    %cst_67 = arith.constant 5.000000e-01 : f32
    %308 = vector.broadcast %cst_67 : f32 to vector<2x96xf32>
    %309 = arith.mulf %308, %307 : vector<2x96xf32>
    %310 = math.tanh %309 : vector<2x96xf32>
    %cst_68 = arith.constant 1.000000e+00 : f32
    %311 = vector.broadcast %cst_68 : f32 to vector<2x96xf32>
    %312 = arith.addf %310, %311 : vector<2x96xf32>
    %cst_69 = arith.constant 5.000000e-01 : f32
    %313 = vector.broadcast %cst_69 : f32 to vector<2x96xf32>
    %314 = arith.mulf %313, %312 : vector<2x96xf32>
    %315 = vector.extract_strided_slice %306 {offsets = [0, 96], sizes = [2, 32], strides = [1, 1]} : vector<2x128xf32> to vector<2x32xf32>
    %316 = math.tanh %315 : vector<2x32xf32>
    %317 = vector.extract_strided_slice %314 {offsets = [0, 0], sizes = [2, 32], strides = [1, 1]} : vector<2x96xf32> to vector<2x32xf32>
    %318 = vector.extract_strided_slice %314 {offsets = [0, 32], sizes = [2, 32], strides = [1, 1]} : vector<2x96xf32> to vector<2x32xf32>
    %319 = vector.extract_strided_slice %314 {offsets = [0, 64], sizes = [2, 32], strides = [1, 1]} : vector<2x96xf32> to vector<2x32xf32>
    %320 = arith.mulf %318, %279 : vector<2x32xf32>
    %321 = arith.mulf %317, %316 : vector<2x32xf32>
    %322 = arith.addf %320, %321 : vector<2x32xf32>
    %323 = math.tanh %322 : vector<2x32xf32>
    %324 = arith.mulf %319, %323 : vector<2x32xf32>
    %325 = vector.extract_strided_slice %19 {offsets = [14, 0], sizes = [2, 128], strides = [1, 1]} : vector<16x128xf32> to vector<2x128xf32>
    %cst_70 = arith.constant dense<0.000000e+00> : vector<2x128xf32>
    %326 = tpu.matmul %302, %1, %cst_70 {dimension_numbers = #tpu.dot_dimension_numbers<[1], [0], [0], [1], [0, 0, 1, 1], [], []>} : vector<2x32xf32>, vector<32x128xf32>, vector<2x128xf32> -> vector<2x128xf32>
    %327 = arith.addf %325, %326 : vector<2x128xf32>
    %328 = vector.extract_strided_slice %327 {offsets = [0, 0], sizes = [2, 96], strides = [1, 1]} : vector<2x128xf32> to vector<2x96xf32>
    %cst_71 = arith.constant 5.000000e-01 : f32
    %329 = vector.broadcast %cst_71 : f32 to vector<2x96xf32>
    %330 = arith.mulf %329, %328 : vector<2x96xf32>
    %331 = math.tanh %330 : vector<2x96xf32>
    %cst_72 = arith.constant 1.000000e+00 : f32
    %332 = vector.broadcast %cst_72 : f32 to vector<2x96xf32>
    %333 = arith.addf %331, %332 : vector<2x96xf32>
    %cst_73 = arith.constant 5.000000e-01 : f32
    %334 = vector.broadcast %cst_73 : f32 to vector<2x96xf32>
    %335 = arith.mulf %334, %333 : vector<2x96xf32>
    %336 = vector.extract_strided_slice %327 {offsets = [0, 96], sizes = [2, 32], strides = [1, 1]} : vector<2x128xf32> to vector<2x32xf32>
    %337 = math.tanh %336 : vector<2x32xf32>
    %338 = vector.extract_strided_slice %335 {offsets = [0, 0], sizes = [2, 32], strides = [1, 1]} : vector<2x96xf32> to vector<2x32xf32>
    %339 = vector.extract_strided_slice %335 {offsets = [0, 32], sizes = [2, 32], strides = [1, 1]} : vector<2x96xf32> to vector<2x32xf32>
    %340 = vector.extract_strided_slice %335 {offsets = [0, 64], sizes = [2, 32], strides = [1, 1]} : vector<2x96xf32> to vector<2x32xf32>
    %341 = arith.mulf %339, %300 : vector<2x32xf32>
    %342 = arith.mulf %338, %337 : vector<2x32xf32>
    %343 = arith.addf %341, %342 : vector<2x32xf32>
    %344 = math.tanh %343 : vector<2x32xf32>
    %345 = arith.mulf %340, %344 : vector<2x32xf32>
    %346 = tpu.concatenate %345, %324 in 1 : vector<2x32xf32>, vector<2x32xf32> -> vector<2x64xf32>
    %cst_74 = arith.constant dense<0.000000e+00> : vector<2x128xf32>
    %347 = tpu.matmul %346, %2, %cst_74 {dimension_numbers = #tpu.dot_dimension_numbers<[1], [0], [0], [1], [0, 0, 1, 1], [], []>} : vector<2x64xf32>, vector<64x128xf32>, vector<2x128xf32> -> vector<2x128xf32>
    %348 = vector.broadcast %5 : vector<1x128xf32> to vector<2x128xf32>
    %349 = arith.addf %347, %348 : vector<2x128xf32>
    %350 = vector.extract_strided_slice %349 {offsets = [0, 0], sizes = [2, 96], strides = [1, 1]} : vector<2x128xf32> to vector<2x96xf32>
    %cst_75 = arith.constant 5.000000e-01 : f32
    %351 = vector.broadcast %cst_75 : f32 to vector<2x96xf32>
    %352 = arith.mulf %351, %350 : vector<2x96xf32>
    %353 = math.tanh %352 : vector<2x96xf32>
    %cst_76 = arith.constant 1.000000e+00 : f32
    %354 = vector.broadcast %cst_76 : f32 to vector<2x96xf32>
    %355 = arith.addf %353, %354 : vector<2x96xf32>
    %cst_77 = arith.constant 5.000000e-01 : f32
    %356 = vector.broadcast %cst_77 : f32 to vector<2x96xf32>
    %357 = arith.mulf %356, %355 : vector<2x96xf32>
    %358 = vector.extract_strided_slice %349 {offsets = [0, 96], sizes = [2, 32], strides = [1, 1]} : vector<2x128xf32> to vector<2x32xf32>
    %359 = math.tanh %358 : vector<2x32xf32>
    %360 = vector.extract_strided_slice %357 {offsets = [0, 0], sizes = [2, 32], strides = [1, 1]} : vector<2x96xf32> to vector<2x32xf32>
    %361 = vector.extract_strided_slice %357 {offsets = [0, 32], sizes = [2, 32], strides = [1, 1]} : vector<2x96xf32> to vector<2x32xf32>
    %362 = vector.extract_strided_slice %357 {offsets = [0, 64], sizes = [2, 32], strides = [1, 1]} : vector<2x96xf32> to vector<2x32xf32>
    %363 = arith.mulf %361, %322 : vector<2x32xf32>
    %364 = arith.mulf %360, %359 : vector<2x32xf32>
    %365 = arith.addf %363, %364 : vector<2x32xf32>
    %366 = math.tanh %365 : vector<2x32xf32>
    %367 = arith.mulf %362, %366 : vector<2x32xf32>
    %368 = vector.extract_strided_slice %0 {offsets = [3, 0], sizes = [1, 128], strides = [1, 1]} : vector<4x128xf32> to vector<1x128xf32>
    %cst_78 = arith.constant 1.000000e+00 : f32
    %369 = vector.broadcast %cst_78 : f32 to vector<2x32xf32>
    %370 = arith.subf %369, %338 : vector<2x32xf32>
    %371 = arith.mulf %338, %370 : vector<2x32xf32>
    %372 = vector.extract_strided_slice %368 {offsets = [0, 0], sizes = [1, 32], strides = [1, 1]} : vector<1x128xf32> to vector<1x32xf32>
    %373 = vector.broadcast %372 : vector<1x32xf32> to vector<2x32xf32>
    %374 = arith.mulf %371, %373 : vector<2x32xf32>
    %cst_79 = arith.constant 1.000000e+00 : f32
    %375 = vector.broadcast %cst_79 : f32 to vector<2x32xf32>
    %376 = arith.subf %375, %339 : vector<2x32xf32>
    %377 = arith.mulf %339, %376 : vector<2x32xf32>
    %378 = vector.extract_strided_slice %368 {offsets = [0, 32], sizes = [1, 32], strides = [1, 1]} : vector<1x128xf32> to vector<1x32xf32>
    %379 = vector.broadcast %378 : vector<1x32xf32> to vector<2x32xf32>
    %380 = arith.mulf %377, %379 : vector<2x32xf32>
    %cst_80 = arith.constant 1.000000e+00 : f32
    %381 = vector.broadcast %cst_80 : f32 to vector<2x32xf32>
    %382 = arith.subf %381, %340 : vector<2x32xf32>
    %383 = arith.mulf %340, %382 : vector<2x32xf32>
    %384 = vector.extract_strided_slice %368 {offsets = [0, 64], sizes = [1, 32], strides = [1, 1]} : vector<1x128xf32> to vector<1x32xf32>
    %385 = vector.broadcast %384 : vector<1x32xf32> to vector<2x32xf32>
    %386 = arith.mulf %383, %385 : vector<2x32xf32>
    %387 = arith.mulf %337, %337 : vector<2x32xf32>
    %cst_81 = arith.constant 1.000000e+00 : f32
    %388 = vector.broadcast %cst_81 : f32 to vector<2x32xf32>
    %389 = arith.subf %388, %387 : vector<2x32xf32>
    %390 = vector.extract_strided_slice %368 {offsets = [0, 96], sizes = [1, 32], strides = [1, 1]} : vector<1x128xf32> to vector<1x32xf32>
    %391 = vector.broadcast %390 : vector<1x32xf32> to vector<2x32xf32>
    %392 = arith.mulf %389, %391 : vector<2x32xf32>
    %393 = arith.mulf %380, %300 : vector<2x32xf32>
    %394 = arith.mulf %374, %337 : vector<2x32xf32>
    %395 = arith.addf %393, %394 : vector<2x32xf32>
    %396 = arith.mulf %338, %392 : vector<2x32xf32>
    %397 = arith.addf %395, %396 : vector<2x32xf32>
    %398 = arith.mulf %386, %344 : vector<2x32xf32>
    %399 = arith.mulf %344, %344 : vector<2x32xf32>
    %cst_82 = arith.constant 1.000000e+00 : f32
    %400 = vector.broadcast %cst_82 : f32 to vector<2x32xf32>
    %401 = arith.subf %400, %399 : vector<2x32xf32>
    %402 = arith.mulf %340, %401 : vector<2x32xf32>
    %403 = arith.mulf %402, %397 : vector<2x32xf32>
    %404 = arith.addf %398, %403 : vector<2x32xf32>
    %405 = vector.extract_strided_slice %2 {offsets = [0, 0], sizes = [32, 128], strides = [1, 1]} : vector<64x128xf32> to vector<32x128xf32>
    %cst_83 = arith.constant dense<0.000000e+00> : vector<2x128xf32>
    %406 = tpu.matmul %404, %405, %cst_83 {dimension_numbers = #tpu.dot_dimension_numbers<[1], [0], [0], [1], [0, 0, 1, 1], [], []>} : vector<2x32xf32>, vector<32x128xf32>, vector<2x128xf32> -> vector<2x128xf32>
    %cst_84 = arith.constant 1.000000e+00 : f32
    %407 = vector.broadcast %cst_84 : f32 to vector<2x32xf32>
    %408 = arith.subf %407, %360 : vector<2x32xf32>
    %409 = arith.mulf %360, %408 : vector<2x32xf32>
    %410 = vector.extract_strided_slice %406 {offsets = [0, 0], sizes = [2, 32], strides = [1, 1]} : vector<2x128xf32> to vector<2x32xf32>
    %411 = arith.mulf %409, %410 : vector<2x32xf32>
    %cst_85 = arith.constant 1.000000e+00 : f32
    %412 = vector.broadcast %cst_85 : f32 to vector<2x32xf32>
    %413 = arith.subf %412, %361 : vector<2x32xf32>
    %414 = arith.mulf %361, %413 : vector<2x32xf32>
    %415 = vector.extract_strided_slice %406 {offsets = [0, 32], sizes = [2, 32], strides = [1, 1]} : vector<2x128xf32> to vector<2x32xf32>
    %416 = arith.mulf %414, %415 : vector<2x32xf32>
    %cst_86 = arith.constant 1.000000e+00 : f32
    %417 = vector.broadcast %cst_86 : f32 to vector<2x32xf32>
    %418 = arith.subf %417, %362 : vector<2x32xf32>
    %419 = arith.mulf %362, %418 : vector<2x32xf32>
    %420 = vector.extract_strided_slice %406 {offsets = [0, 64], sizes = [2, 32], strides = [1, 1]} : vector<2x128xf32> to vector<2x32xf32>
    %421 = arith.mulf %419, %420 : vector<2x32xf32>
    %422 = arith.mulf %359, %359 : vector<2x32xf32>
    %cst_87 = arith.constant 1.000000e+00 : f32
    %423 = vector.broadcast %cst_87 : f32 to vector<2x32xf32>
    %424 = arith.subf %423, %422 : vector<2x32xf32>
    %425 = vector.extract_strided_slice %406 {offsets = [0, 96], sizes = [2, 32], strides = [1, 1]} : vector<2x128xf32> to vector<2x32xf32>
    %426 = arith.mulf %424, %425 : vector<2x32xf32>
    %427 = arith.mulf %416, %322 : vector<2x32xf32>
    %428 = arith.mulf %411, %359 : vector<2x32xf32>
    %429 = arith.addf %427, %428 : vector<2x32xf32>
    %430 = arith.mulf %360, %426 : vector<2x32xf32>
    %431 = arith.addf %429, %430 : vector<2x32xf32>
    %432 = arith.mulf %421, %366 : vector<2x32xf32>
    %433 = arith.mulf %366, %366 : vector<2x32xf32>
    %cst_88 = arith.constant 1.000000e+00 : f32
    %434 = vector.broadcast %cst_88 : f32 to vector<2x32xf32>
    %435 = arith.subf %434, %433 : vector<2x32xf32>
    %436 = arith.mulf %362, %435 : vector<2x32xf32>
    %437 = arith.mulf %436, %431 : vector<2x32xf32>
    %438 = arith.addf %432, %437 : vector<2x32xf32>
    %439 = vector.broadcast %6 : vector<1x32xf32> to vector<2x32xf32>
    %440 = arith.mulf %438, %439 : vector<2x32xf32>
    %cst_89 = arith.constant dense<0.000000e+00> : vector<2xf32>
    %441 = vector.multi_reduction <add>, %440, %cst_89 [1] : vector<2x32xf32> to vector<2xf32>
    %442 = vector.shape_cast %441 : vector<2xf32> to vector<2x1xf32>
    %443 = vector.broadcast %6 : vector<1x32xf32> to vector<2x32xf32>
    %444 = arith.mulf %367, %443 : vector<2x32xf32>
    %cst_90 = arith.constant dense<0.000000e+00> : vector<2xf32>
    %445 = vector.multi_reduction <add>, %444, %cst_90 [1] : vector<2x32xf32> to vector<2xf32>
    %446 = vector.shape_cast %445 : vector<2xf32> to vector<2x1xf32>
    %447 = vector.broadcast %12 : f32 to vector<2x1xf32>
    %448 = arith.addf %446, %447 : vector<2x1xf32>
    %449 = vector.broadcast %448 : vector<2x1xf32> to vector<2x32xf32>
    %450 = vector.broadcast %7 : vector<1x32xf32> to vector<2x32xf32>
    %451 = arith.mulf %449, %450 : vector<2x32xf32>
    %452 = vector.broadcast %8 : vector<1x32xf32> to vector<2x32xf32>
    %453 = arith.addf %451, %452 : vector<2x32xf32>
    %454 = vector.broadcast %9 : vector<1x32xf32> to vector<2x32xf32>
    %455 = arith.mulf %453, %454 : vector<2x32xf32>
    %cst_91 = arith.constant dense<0.000000e+00> : vector<2xf32>
    %456 = vector.multi_reduction <add>, %455, %cst_91 [1] : vector<2x32xf32> to vector<2xf32>
    %457 = vector.shape_cast %456 : vector<2xf32> to vector<2x1xf32>
    %458 = vector.broadcast %13 : f32 to vector<2x1xf32>
    %459 = arith.addf %457, %458 : vector<2x1xf32>
    %c0_92 = arith.constant 0 : index
    %c0_93 = arith.constant 0 : index
    %460 = vector.load %arg5[%c0_92, %c0_93] : memref<2x24xf32, #tpu.memory_space<vmem>>, vector<2x24xf32>
    %461 = vector.extract_strided_slice %460 {offsets = [0, 0], sizes = [2, 8], strides = [1, 1]} : vector<2x24xf32> to vector<2x8xf32>
    %462 = vector.extract_strided_slice %460 {offsets = [0, 8], sizes = [2, 8], strides = [1, 1]} : vector<2x24xf32> to vector<2x8xf32>
    %463 = vector.extract_strided_slice %460 {offsets = [0, 16], sizes = [2, 8], strides = [1, 1]} : vector<2x24xf32> to vector<2x8xf32>
    %464 = vector.extract_strided_slice %460 {offsets = [0, 0], sizes = [2, 16], strides = [1, 1]} : vector<2x24xf32> to vector<2x16xf32>
    %c0_94 = arith.constant 0 : index
    %c0_95 = arith.constant 0 : index
    %465 = vector.load %arg6[%c0_94, %c0_95] : memref<16x16xf32, #tpu.memory_space<vmem>>, vector<16x16xf32>
    %cst_96 = arith.constant dense<0.000000e+00> : vector<2x16xf32>
    %466 = tpu.matmul %464, %465, %cst_96 {dimension_numbers = #tpu.dot_dimension_numbers<[1], [0], [0], [1], [0, 0, 1, 1], [], []>} : vector<2x16xf32>, vector<16x16xf32>, vector<2x16xf32> -> vector<2x16xf32>
    %467 = vector.extract_strided_slice %466 {offsets = [0, 0], sizes = [2, 8], strides = [1, 1]} : vector<2x16xf32> to vector<2x8xf32>
    %468 = vector.extract_strided_slice %466 {offsets = [0, 8], sizes = [2, 8], strides = [1, 1]} : vector<2x16xf32> to vector<2x8xf32>
    %469 = arith.subf %462, %468 : vector<2x8xf32>
    %470 = vector.broadcast %10 : vector<1x8xf32> to vector<2x8xf32>
    %471 = arith.mulf %469, %470 : vector<2x8xf32>
    %472 = vector.broadcast %11 : vector<1x8xf32> to vector<2x8xf32>
    %473 = arith.addf %471, %472 : vector<2x8xf32>
    %474 = math.sqrt %473 : vector<2x8xf32>
    %475 = arith.mulf %14, %15 : f32
    %cst_97 = arith.constant 1.000000e+00 : f32
    %476 = arith.divf %cst_97, %475 : f32
    %cst_98 = arith.constant 1.000000e+00 : f32
    %477 = arith.divf %cst_98, %15 : f32
    %478 = vector.broadcast %477 : f32 to vector<2x8xf32>
    %479 = arith.mulf %463, %478 : vector<2x8xf32>
    %480 = vector.broadcast %476 : f32 to vector<2x8xf32>
    %481 = arith.mulf %461, %480 : vector<2x8xf32>
    %482 = arith.subf %479, %481 : vector<2x8xf32>
    %483 = arith.mulf %474, %482 : vector<2x8xf32>
    %484 = arith.subf %483, %467 : vector<2x8xf32>
    %c0_99 = arith.constant 0 : index
    %c0_100 = arith.constant 0 : index
    %485 = vector.load %arg8[%c0_99, %c0_100] : memref<2x8xf32, #tpu.memory_space<vmem>>, vector<2x8xf32>
    tpu.vector_store %arg8[%c0_99, %c0_100], %484 {strides = array<i32>} : memref<2x8xf32, #tpu.memory_space<vmem>>, vector<2x8xf32>,
    %c0_101 = arith.constant 0 : index
    %c0_102 = arith.constant 0 : index
    %486 = vector.load %arg9[%c0_101, %c0_102] : memref<2x3xf32, #tpu.memory_space<vmem>>, vector<2x1xf32>
    tpu.vector_store %arg9[%c0_101, %c0_102], %448 {strides = array<i32>} : memref<2x3xf32, #tpu.memory_space<vmem>>, vector<2x1xf32>,
    %c0_103 = arith.constant 0 : index
    %c1_104 = arith.constant 1 : index
    %487 = vector.load %arg9[%c0_103, %c1_104] : memref<2x3xf32, #tpu.memory_space<vmem>>, vector<2x1xf32>
    tpu.vector_store %arg9[%c0_103, %c1_104], %442 {strides = array<i32>} : memref<2x3xf32, #tpu.memory_space<vmem>>, vector<2x1xf32>,
    %c0_105 = arith.constant 0 : index
    %c2_106 = arith.constant 2 : index
    %488 = vector.load %arg9[%c0_105, %c2_106] : memref<2x3xf32, #tpu.memory_space<vmem>>, vector<2x1xf32>
    tpu.vector_store %arg9[%c0_105, %c2_106], %459 {strides = array<i32>} : memref<2x3xf32, #tpu.memory_space<vmem>>, vector<2x1xf32>,
    return
  }
}

</mosaic_0001>

<llo_original>
// kernel: tpu_custom_call.1
$region0: #{tpu_custom_call.1}
  #allocation0 [shape = 'u32[]', space=smem, size = 0x4, offset = 0x4, fixed_abs, tag = 'smem constant byte address 0x4 - core index']
  #allocation1 [shape = 'u32[144,128]{1,0:T(1,128)}', space=vmem, size = 0x12000, scoped, tag = 'internal scratch']
  %s0 = inlined_call_operand.vmem [shape: f32[16,4], index: 0, kind: input, shape index: {}]
  %s1 = inlined_call_operand.vmem [shape: f32[4,128], index: 1, kind: input, shape index: {}]
  %s2 = inlined_call_operand.hbm [shape: f32[32,128], index: 2, kind: input, shape index: {}]
  %s3 = inlined_call_operand.hbm [shape: f32[64,128], index: 3, kind: input, shape index: {}]
  %s4 = inlined_call_operand.vmem [shape: f32[4,128], index: 4, kind: input, shape index: {}]
  %s5 = inlined_call_operand.vmem [shape: f32[2,24], index: 5, kind: input, shape index: {}]
  %s6 = inlined_call_operand.vmem [shape: f32[16,16], index: 6, kind: input, shape index: {}]
  %s7 = inlined_call_operand.vmem [shape: f32[4], index: 7, kind: input, shape index: {}]
  %s8 = inlined_call_operand.hbm [shape: f32[2,8], index: 8, kind: output, shape index: {0}]
  %s9 = inlined_call_operand.hbm [shape: f32[2,3], index: 9, kind: output, shape index: {1}]
  %10 = xla_tuple %s8, %s9
  %s11 = sld [smem:[#allocation0]]
  $region62: #{tpu_custom_call.1} parent=0
    _
  %s13 = ssub.s32 1, %s11
  %s14 = scalar_select 0, %s13, %s11
  $region1: #{tpu_custom_call.1} parent=0
    #allocation2 [shape = 'u8[16384]{0}', space=vmem, size = 0x4000, scoped, tag = 'input window, operand 2, single buffered']
    #allocation3 [shape = 's32[1]{0}', space=sflag, size = 0x4, scoped, tag = 'scoped memory for tpu_custom_call.1']
    #allocation4 [shape = 's32[1]{0}', space=sflag, size = 0x4, scoped, tag = 'scoped memory for tpu_custom_call.1']
    #allocation5 [shape = 's32[1]{0}', space=sflag, size = 0x4, scoped, tag = 'scoped memory for tpu_custom_call.1']
    #allocation6 [shape = 'u8[32768]{0}', space=vmem, size = 0x8000, scoped, tag = 'input window, operand 3, single buffered']
    #allocation7 [shape = 's32[1]{0}', space=sflag, size = 0x4, scoped, tag = 'scoped memory for tpu_custom_call.1']
    #allocation8 [shape = 'u8[512]{0}', space=smem, size = 0x200, scoped, tag = 'input window, operand 7, single buffered']
    #allocation9 [shape = 'u8[1024]{0}', space=vmem, size = 0x400, scoped, tag = 'output window, operand 0, single buffered']
    #allocation10 [shape = 'u8[1024]{0}', space=vmem, size = 0x400, scoped, tag = 'output window, operand 1, single buffered']
    #allocation11 [shape = 's32[1]{0}', space=sflag, size = 0x4, scoped, tag = 'scoped memory for tpu_custom_call.1']
    %15 = vsyncpa [#allocation3], 0
    %16 = vsyncpa [#allocation7], 0
    %17 = vsyncpa [#allocation5], 0
    %18 = vsyncpa [#allocation4], 0
    %19 = vsyncpa [#allocation11], 0
    // Predicated region
    $region2: #{tpu_custom_call.1} parent=1 // pred_check
      _
    $region3: #{tpu_custom_call.1} parent=1 // pred_check_branch
      %21 = sbr.rel (0) target = $region5
    $region4: #{tpu_custom_call.1} parent=1 // pred_region
      _
    $region5: #{tpu_custom_call.1} parent=1 // pred_fallthru
      _
    // Predicated region
    $region6: #{tpu_custom_call.1} parent=1 // pred_check
      _
    $region7: #{tpu_custom_call.1} parent=1 // pred_check_branch
      %23 = sbr.rel (0) target = $region9
    $region8: #{tpu_custom_call.1} parent=1 // pred_region
      _
    $region9: #{tpu_custom_call.1} parent=1 // pred_fallthru
      _
    // Predicated region
    $region10: #{tpu_custom_call.1} parent=1 // pred_check
      _
    $region11: #{tpu_custom_call.1} parent=1 // pred_check_branch
      %25 = sbr.rel (0) target = $region13
    $region12: #{tpu_custom_call.1} parent=1 // pred_region
      %s27 = ssub.s32 512, 512
      %28 = vsyncadd [#allocation3], %s27
      %s29 = sshll.u32 [#allocation2], 4
      %s30 = int_to_ptr.vmem [resolvable:$true] %s29
      %35 = dma.hbm_to_vmem [thread:$0]  %s2, 512, %s30, [#allocation3], 128, 128, 8
    $region13: #{tpu_custom_call.1} parent=1 // pred_fallthru
      _
    // Predicated region
    $region14: #{tpu_custom_call.1} parent=1 // pred_check
      _
    $region15: #{tpu_custom_call.1} parent=1 // pred_check_branch
      %37 = sbr.rel (0) target = $region17
    $region16: #{tpu_custom_call.1} parent=1 // pred_region
      %s39 = ssub.s32 1024, 1024
      %40 = vsyncadd [#allocation7], %s39
      %s41 = sshll.u32 [#allocation6], 4
      %s42 = int_to_ptr.vmem [resolvable:$true] %s41
      %47 = dma.hbm_to_vmem [thread:$0]  %s3, 1024, %s42, [#allocation7], 128, 128, 8
    $region17: #{tpu_custom_call.1} parent=1 // pred_fallthru
      _
    // Predicated region
    $region18: #{tpu_custom_call.1} parent=1 // pred_check
      _
    $region19: #{tpu_custom_call.1} parent=1 // pred_check_branch
      %49 = sbr.rel (0) target = $region21
    $region20: #{tpu_custom_call.1} parent=1 // pred_region
      _
    $region21: #{tpu_custom_call.1} parent=1 // pred_fallthru
      _
    // Predicated region
    $region22: #{tpu_custom_call.1} parent=1 // pred_check
      _
    $region23: #{tpu_custom_call.1} parent=1 // pred_check_branch
      %51 = sbr.rel (0) target = $region25
    $region24: #{tpu_custom_call.1} parent=1 // pred_region
      _
    $region25: #{tpu_custom_call.1} parent=1 // pred_fallthru
      _
    // Predicated region
    $region26: #{tpu_custom_call.1} parent=1 // pred_check
      _
    $region27: #{tpu_custom_call.1} parent=1 // pred_check_branch
      %53 = sbr.rel (0) target = $region29
    $region28: #{tpu_custom_call.1} parent=1 // pred_region
      _
    $region29: #{tpu_custom_call.1} parent=1 // pred_fallthru
      _
    // Predicated region
    $region30: #{tpu_custom_call.1} parent=1 // pred_check
      _
    $region31: #{tpu_custom_call.1} parent=1 // pred_check_branch
      %55 = sbr.rel (0) target = $region33
    $region32: #{tpu_custom_call.1} parent=1 // pred_region
      %s57 = ssub.s32 16, 16
      %58 = vsyncadd [#allocation5], %s57
      %s60 = sshll.u32 %s7, 4
      %s61 = int_to_ptr.vmem [resolvable:$true] %s60
      %63 = dma.vmem_to_smem %s61, 16, [#allocation8], [#allocation5]
    $region33: #{tpu_custom_call.1} parent=1 // pred_fallthru
      _
    // Predicated region
    $region34: #{tpu_custom_call.1} parent=1 // pred_check
      _
    $region35: #{tpu_custom_call.1} parent=1 // pred_check_branch
      %65 = sbr.rel (0) target = $region37
    $region36: #{tpu_custom_call.1} parent=1 // pred_region
      %66 = dma.done [#allocation3], 512
    $region37: #{tpu_custom_call.1} parent=1 // pred_fallthru
      _
    // Predicated region
    $region38: #{tpu_custom_call.1} parent=1 // pred_check
      _
    $region39: #{tpu_custom_call.1} parent=1 // pred_check_branch
      %68 = sbr.rel (0) target = $region41
    $region40: #{tpu_custom_call.1} parent=1 // pred_region
      %69 = dma.done [#allocation7], 1024
    $region41: #{tpu_custom_call.1} parent=1 // pred_fallthru
      _
    // Predicated region
    $region42: #{tpu_custom_call.1} parent=1 // pred_check
      _
    $region43: #{tpu_custom_call.1} parent=1 // pred_check_branch
      %71 = sbr.rel (0) target = $region45
    $region44: #{tpu_custom_call.1} parent=1 // pred_region
      %72 = dma.done [#allocation5], 16
    $region45: #{tpu_custom_call.1} parent=1 // pred_fallthru
      _
    %73 = sfence
    %v74 = vld [vmem:[%s1] sm:$0xf]
    %v75 = vld [vmem:[#allocation2] sm:$0xff]
    %v76 = vld [vmem:[#allocation2 + $0x8] sm:$0xff]
    %v77 = vld [vmem:[#allocation2 + $0x10] sm:$0xff]
    %v78 = vld [vmem:[#allocation2 + $0x18] sm:$0xff]
    %v79 = vld [vmem:[#allocation6] sm:$0xff]
    %v80 = vld [vmem:[#allocation6 + $0x8] sm:$0xff]
    %v81 = vld [vmem:[#allocation6 + $0x10] sm:$0xff]
    %v82 = vld [vmem:[#allocation6 + $0x18] sm:$0xff]
    %v83 = vld [vmem:[#allocation6 + $0x20] sm:$0xff]
    %v84 = vld [vmem:[#allocation6 + $0x28] sm:$0xff]
    %v85 = vld [vmem:[#allocation6 + $0x30] sm:$0xff]
    %v86 = vld [vmem:[#allocation6 + $0x38] sm:$0xff]
    %v87 = vld [vmem:[%s4] sm:$0xf]
    %s88 = sld [smem:[#allocation8]]
    %s89 = sld [smem:[#allocation8 + $0x1]]
    %s90 = sld [smem:[#allocation8 + $0x2]]
    %s91 = sld [smem:[#allocation8 + $0x3]]
    %v92 = vld [vmem:[%s0] sm:$0xff]
    %v93 = vld [vmem:[%s0 + $0x8] sm:$0xff]
    %v94 = vlaneseq
    %v95 = vshrl.u32 %v94, 7
    %v96 = vsub.s32 0, %v95
    %v97 = vrot.slane %v87, %v96
    %vm98 = vcmask 31744
    %v100 = vsel %vm98, %v92, 0
    %v103 = vsel %vm98, %v93, 0
    %vm105 = vcmask 1043456
    %v107 = vsel %vm105, %v74, 0
    %109 = vmatprep.subr.mxu0 0.0
    %110 = vmatpush1.msra.mxu0 0.0
    %111 = vmatprep.subr.mxu0 0.0
    %112 = vmatpush1.msra.mxu0 0.0
    %113 = vmatprep.subr.mxu0 0.0
    %114 = vmatpush1.msra.mxu0 0.0
    %115 = vmatprep.subr.mxu0 0.0
    %116 = vmatpush1.msra.mxu0 0.0
    %117 = vmatprep.subr.mxu0 0.0
    %118 = vmatpush1.msra.mxu0 0.0
    %119 = vmatprep.subr.mxu0 0.0
    %120 = vmatpush1.msra.mxu0 0.0
    %121 = vmatprep.subr.mxu0 0.0
    %122 = vmatpush1.msra.mxu0 0.0
    %123 = vmatprep.subr.mxu0 0.0
    %124 = vmatpush1.msra.mxu0 0.0
    %125 = vmatprep.subr.mxu0 0.0
    %126 = vmatpush1.msra.mxu0 0.0
    %127 = vmatprep.subr.mxu0 0.0
    %128 = vmatpush1.msra.mxu0 0.0
    %129 = vmatprep.subr.mxu0 0.0
    %130 = vmatpush1.msra.mxu0 0.0
    %131 = vmatprep.subr.mxu0 0.0
    %132 = vmatpush1.msra.mxu0 0.0
    %133 = vmatprep.subr.mxu0 0.0
    %134 = vmatpush1.msra.mxu0 0.0
    %135 = vmatprep.subr.mxu0 0.0
    %136 = vmatpush1.msra.mxu0 0.0
    %137 = vmatprep.subr.mxu0 0.0
    %138 = vmatpush1.msra.mxu0 0.0
    %139 = vmatprep.subr.mxu0 0.0
    %140 = vmatpush1.msra.mxu0 %v107
    %141 = vmatprep.subr.mxu0 0.0
    %142 = vmatpush2.msra.mxu0 0.0
    %143 = vmatprep.subr.mxu0 0.0
    %144 = vmatpush2.msra.mxu0 0.0
    %145 = vmatprep.subr.mxu0 0.0
    %146 = vmatpush2.msra.mxu0 0.0
    %147 = vmatprep.subr.mxu0 0.0
    %148 = vmatpush2.msra.mxu0 0.0
    %149 = vmatprep.subr.mxu0 0.0
    %150 = vmatpush2.msra.mxu0 0.0
    %151 = vmatprep.subr.mxu0 0.0
    %152 = vmatpush2.msra.mxu0 0.0
    %153 = vmatprep.subr.mxu0 0.0
    %154 = vmatpush2.msra.mxu0 0.0
    %155 = vmatprep.subr.mxu0 0.0
    %156 = vmatpush2.msra.mxu0 0.0
    %157 = vmatprep.subr.mxu0 0.0
    %158 = vmatpush2.msra.mxu0 0.0
    %159 = vmatprep.subr.mxu0 0.0
    %160 = vmatpush2.msra.mxu0 0.0
    %161 = vmatprep.subr.mxu0 0.0
    %162 = vmatpush2.msra.mxu0 0.0
    %163 = vmatprep.subr.mxu0 0.0
    %164 = vmatpush2.msra.mxu0 0.0
    %165 = vmatprep.subr.mxu0 0.0
    %166 = vmatpush2.msra.mxu0 0.0
    %167 = vmatprep.subr.mxu0 0.0
    %168 = vmatpush2.msra.mxu0 0.0
    %169 = vmatprep.subr.mxu0 0.0
    %170 = vmatpush2.msra.mxu0 0.0
    %171 = vmatprep.subr.mxu0 0.0
    %172 = vmatpush2.msra.mxu0 0.0
    %173 = vmatprep.mubr.f32.mxu0 0.0
    %174 = vmatmul.mubr.f32.gmra.mxu0 %v100
    %v175 = vpop.f32.mrf.mxu0
    %v176 = vadd.f32 %v97, %v175
    %v177 = vpop.f32.mrf.mxu0
    %178 = vmatprep.mubr.f32.mxu0 0.0
    %179 = vmatmul.mubr.f32.gmra.mxu0 %v103
    %v180 = vpop.f32.mrf.mxu0
    %v181 = vadd.f32 %v97, %v180
    %v182 = vpop.f32.mrf.mxu0
    %183 = vdwg.mxu0
    %vm184 = vcmask 261120
    %v186 = vsel %vm184, 0.0, 0
    %188 = vmatprep.subr.mxu0 0.0
    %189 = vmatpush1.msra.mxu0 0.0
    %190 = vmatprep.subr.mxu0 0.0
    %191 = vmatpush1.msra.mxu0 0.0
    %192 = vmatprep.subr.mxu0 0.0
    %193 = vmatpush1.msra.mxu0 0.0
    %194 = vmatprep.subr.mxu0 0.0
    %195 = vmatpush1.msra.mxu0 0.0
    %196 = vmatprep.subr.mxu0 0.0
    %197 = vmatpush1.msra.mxu0 0.0
    %198 = vmatprep.subr.mxu0 0.0
    %199 = vmatpush1.msra.mxu0 0.0
    %200 = vmatprep.subr.mxu0 0.0
    %201 = vmatpush1.msra.mxu0 0.0
    %202 = vmatprep.subr.mxu0 0.0
    %203 = vmatpush1.msra.mxu0 0.0
    %204 = vmatprep.subr.mxu0 0.0
    %205 = vmatpush1.msra.mxu0 0.0
    %206 = vmatprep.subr.mxu0 0.0
    %207 = vmatpush1.msra.mxu0 0.0
    %208 = vmatprep.subr.mxu0 0.0
    %209 = vmatpush1.msra.mxu0 0.0
    %210 = vmatprep.subr.mxu0 0.0
    %211 = vmatpush1.msra.mxu0 0.0
    %212 = vmatprep.subr.mxu0 0.0
    %213 = vmatpush1.msra.mxu0 %v78
    %214 = vmatprep.subr.mxu0 0.0
    %215 = vmatpush1.msra.mxu0 %v77
    %216 = vmatprep.subr.mxu0 0.0
    %217 = vmatpush1.msra.mxu0 %v76
    %218 = vmatprep.subr.mxu0 0.0
    %219 = vmatpush1.msra.mxu0 %v75
    %220 = vmatprep.subr.mxu0 0.0
    %221 = vmatpush2.msra.mxu0 0.0
    %222 = vmatprep.subr.mxu0 0.0
    %223 = vmatpush2.msra.mxu0 0.0
    %224 = vmatprep.subr.mxu0 0.0
    %225 = vmatpush2.msra.mxu0 0.0
    %226 = vmatprep.subr.mxu0 0.0
    %227 = vmatpush2.msra.mxu0 0.0
    %228 = vmatprep.subr.mxu0 0.0
    %229 = vmatpush2.msra.mxu0 0.0
    %230 = vmatprep.subr.mxu0 0.0
    %231 = vmatpush2.msra.mxu0 0.0
    %232 = vmatprep.subr.mxu0 0.0
    %233 = vmatpush2.msra.mxu0 0.0
    %234 = vmatprep.subr.mxu0 0.0
    %235 = vmatpush2.msra.mxu0 0.0
    %236 = vmatprep.subr.mxu0 0.0
    %237 = vmatpush2.msra.mxu0 0.0
    %238 = vmatprep.subr.mxu0 0.0
    %239 = vmatpush2.msra.mxu0 0.0
    %240 = vmatprep.subr.mxu0 0.0
    %241 = vmatpush2.msra.mxu0 0.0
    %242 = vmatprep.subr.mxu0 0.0
    %243 = vmatpush2.msra.mxu0 0.0
    %244 = vmatprep.subr.mxu0 0.0
    %245 = vmatpush2.msra.mxu0 0.0
    %246 = vmatprep.subr.mxu0 0.0
    %247 = vmatpush2.msra.mxu0 0.0
    %248 = vmatprep.subr.mxu0 0.0
    %249 = vmatpush2.msra.mxu0 0.0
    %250 = vmatprep.subr.mxu0 0.0
    %251 = vmatpush2.msra.mxu0 0.0
    %252 = vmatprep.mubr.f32.mxu0 0.0
    %253 = vmatmul.mubr.f32.gmra.mxu0 %v186
    %v254 = vpop.f32.mrf.mxu0
    %v255 = vadd.f32 0.0, %v254
    %v256 = vpop.f32.mrf.mxu0
    %257 = vdwg.mxu0
    %v258 = vadd.f32 %v176, %v255
    %v259 = vmul.f32 %v258, 0.5
    %v260 = vtanh.pop %v259
    %v261 = vadd.f32 %v260, 1.0
    %v262 = vmul.f32 %v261, 0.5
    %v263 = vtanh.pop %v258
    %v264 = vmul.f32 %v262, 0.0
    %266 = vrot.lane.b32.xlu0 %v263, 32
    %v267 = vpop.permute.xlu0 %266
    %v269 = vmul.f32 %v262, %v267
    %271 = vrot.lane.b32.xlu0 %v269, 32
    %v272 = vpop.permute.xlu0 %271
    %v274 = vadd.f32 %v264, %v272
    %v275 = vtanh.pop %v274
    %277 = vrot.lane.b32.xlu0 %v275, 32
    %v278 = vpop.permute.xlu0 %277
    %v280 = vmul.f32 %v262, %v278
    %282 = vrot.lane.b32.xlu0 %v280, 64
    %v283 = vpop.permute.xlu0 %282
    %v285 = vsel %vm184, %v283, 0.0
    %v286 = vlaneseq
    %v287 = vshrl.u32 %v286, 7
    %v288 = vsub.s32 1, %v287
    %v289 = vrot.slane %v87, %v288
    %vm290 = vcmask 523264
    %v292 = vsel %vm290, %v285, 0
    %294 = vmatprep.subr.mxu0 0.0
    %295 = vmatpush1.msra.mxu0 0.0
    %296 = vmatprep.subr.mxu0 0.0
    %297 = vmatpush1.msra.mxu0 0.0
    %298 = vmatprep.subr.mxu0 0.0
    %299 = vmatpush1.msra.mxu0 0.0
    %300 = vmatprep.subr.mxu0 0.0
    %301 = vmatpush1.msra.mxu0 0.0
    %302 = vmatprep.subr.mxu0 0.0
    %303 = vmatpush1.msra.mxu0 0.0
    %304 = vmatprep.subr.mxu0 0.0
    %305 = vmatpush1.msra.mxu0 0.0
    %306 = vmatprep.subr.mxu0 0.0
    %307 = vmatpush1.msra.mxu0 0.0
    %308 = vmatprep.subr.mxu0 0.0
    %309 = vmatpush1.msra.mxu0 0.0
    %310 = vmatprep.subr.mxu0 0.0
    %311 = vmatpush1.msra.mxu0 %v86
    %312 = vmatprep.subr.mxu0 0.0
    %313 = vmatpush1.msra.mxu0 %v85
    %314 = vmatprep.subr.mxu0 0.0
    %315 = vmatpush1.msra.mxu0 %v84
    %316 = vmatprep.subr.mxu0 0.0
    %317 = vmatpush1.msra.mxu0 %v83
    %318 = vmatprep.subr.mxu0 0.0
    %319 = vmatpush1.msra.mxu0 %v82
    %320 = vmatprep.subr.mxu0 0.0
    %321 = vmatpush1.msra.mxu0 %v81
    %322 = vmatprep.subr.mxu0 0.0
    %323 = vmatpush1.msra.mxu0 %v80
    %324 = vmatprep.subr.mxu0 0.0
    %325 = vmatpush1.msra.mxu0 %v79
    %326 = vmatprep.subr.mxu0 0.0
    %327 = vmatpush2.msra.mxu0 0.0
    %328 = vmatprep.subr.mxu0 0.0
    %329 = vmatpush2.msra.mxu0 0.0
    %330 = vmatprep.subr.mxu0 0.0
    %331 = vmatpush2.msra.mxu0 0.0
    %332 = vmatprep.subr.mxu0 0.0
    %333 = vmatpush2.msra.mxu0 0.0
    %334 = vmatprep.subr.mxu0 0.0
    %335 = vmatpush2.msra.mxu0 0.0
    %336 = vmatprep.subr.mxu0 0.0
    %337 = vmatpush2.msra.mxu0 0.0
    %338 = vmatprep.subr.mxu0 0.0
    %339 = vmatpush2.msra.mxu0 0.0
    %340 = vmatprep.subr.mxu0 0.0
    %341 = vmatpush2.msra.mxu0 0.0
    %342 = vmatprep.subr.mxu0 0.0
    %343 = vmatpush2.msra.mxu0 0.0
    %344 = vmatprep.subr.mxu0 0.0
    %345 = vmatpush2.msra.mxu0 0.0
    %346 = vmatprep.subr.mxu0 0.0
    %347 = vmatpush2.msra.mxu0 0.0
    %348 = vmatprep.subr.mxu0 0.0
    %349 = vmatpush2.msra.mxu0 0.0
    %350 = vmatprep.subr.mxu0 0.0
    %351 = vmatpush2.msra.mxu0 0.0
    %352 = vmatprep.subr.mxu0 0.0
    %353 = vmatpush2.msra.mxu0 0.0
    %354 = vmatprep.subr.mxu0 0.0
    %355 = vmatpush2.msra.mxu0 0.0
    %356 = vmatprep.subr.mxu0 0.0
    %357 = vmatpush2.msra.mxu0 0.0
    %358 = vmatprep.mubr.f32.mxu0 0.0
    %359 = vmatmul.mubr.f32.gmra.mxu0 %v292
    %v360 = vpop.f32.mrf.mxu0
    %v361 = vadd.f32 %v289, %v360
    %v362 = vpop.f32.mrf.mxu0
    %363 = vdwg.mxu0
    %v364 = vmul.f32 %v361, 0.5
    %v365 = vtanh.pop %v364
    %v366 = vadd.f32 %v365, 1.0
    %v367 = vmul.f32 %v366, 0.5
    %v368 = vtanh.pop %v361
    %v369 = vmul.f32 %v367, 0.0
    %371 = vrot.lane.b32.xlu0 %v368, 32
    %v372 = vpop.permute.xlu0 %371
    %v374 = vmul.f32 %v367, %v372
    %376 = vrot.lane.b32.xlu0 %v374, 32
    %v377 = vpop.permute.xlu0 %376
    %v379 = vadd.f32 %v369, %v377
    %v380 = vtanh.pop %v379
    %382 = vrot.lane.b32.xlu0 %v380, 32
    %v383 = vpop.permute.xlu0 %382
    %v385 = vmul.f32 %v367, %v383
    %v386 = vsel %vm184, %v283, 0
    %388 = vmatprep.subr.mxu0 0.0
    %389 = vmatpush1.msra.mxu0 0.0
    %390 = vmatprep.subr.mxu0 0.0
    %391 = vmatpush1.msra.mxu0 0.0
    %392 = vmatprep.subr.mxu0 0.0
    %393 = vmatpush1.msra.mxu0 0.0
    %394 = vmatprep.subr.mxu0 0.0
    %395 = vmatpush1.msra.mxu0 0.0
    %396 = vmatprep.subr.mxu0 0.0
    %397 = vmatpush1.msra.mxu0 0.0
    %398 = vmatprep.subr.mxu0 0.0
    %399 = vmatpush1.msra.mxu0 0.0
    %400 = vmatprep.subr.mxu0 0.0
    %401 = vmatpush1.msra.mxu0 0.0
    %402 = vmatprep.subr.mxu0 0.0
    %403 = vmatpush1.msra.mxu0 0.0
    %404 = vmatprep.subr.mxu0 0.0
    %405 = vmatpush1.msra.mxu0 0.0
    %406 = vmatprep.subr.mxu0 0.0
    %407 = vmatpush1.msra.mxu0 0.0
    %408 = vmatprep.subr.mxu0 0.0
    %409 = vmatpush1.msra.mxu0 0.0
    %410 = vmatprep.subr.mxu0 0.0
    %411 = vmatpush1.msra.mxu0 0.0
    %412 = vmatprep.subr.mxu0 0.0
    %413 = vmatpush1.msra.mxu0 %v78
    %414 = vmatprep.subr.mxu0 0.0
    %415 = vmatpush1.msra.mxu0 %v77
    %416 = vmatprep.subr.mxu0 0.0
    %417 = vmatpush1.msra.mxu0 %v76
    %418 = vmatprep.subr.mxu0 0.0
    %419 = vmatpush1.msra.mxu0 %v75
    %420 = vmatprep.subr.mxu0 0.0
    %421 = vmatpush2.msra.mxu0 0.0
    %422 = vmatprep.subr.mxu0 0.0
    %423 = vmatpush2.msra.mxu0 0.0
    %424 = vmatprep.subr.mxu0 0.0
    %425 = vmatpush2.msra.mxu0 0.0
    %426 = vmatprep.subr.mxu0 0.0
    %427 = vmatpush2.msra.mxu0 0.0
    %428 = vmatprep.subr.mxu0 0.0
    %429 = vmatpush2.msra.mxu0 0.0
    %430 = vmatprep.subr.mxu0 0.0
    %431 = vmatpush2.msra.mxu0 0.0
    %432 = vmatprep.subr.mxu0 0.0
    %433 = vmatpush2.msra.mxu0 0.0
    %434 = vmatprep.subr.mxu0 0.0
    %435 = vmatpush2.msra.mxu0 0.0
    %436 = vmatprep.subr.mxu0 0.0
    %437 = vmatpush2.msra.mxu0 0.0
    %438 = vmatprep.subr.mxu0 0.0
    %439 = vmatpush2.msra.mxu0 0.0
    %440 = vmatprep.subr.mxu0 0.0
    %441 = vmatpush2.msra.mxu0 0.0
    %442 = vmatprep.subr.mxu0 0.0
    %443 = vmatpush2.msra.mxu0 0.0
    %444 = vmatprep.subr.mxu0 0.0
    %445 = vmatpush2.msra.mxu0 0.0
    %446 = vmatprep.subr.mxu0 0.0
    %447 = vmatpush2.msra.mxu0 0.0
    %448 = vmatprep.subr.mxu0 0.0
    %449 = vmatpush2.msra.mxu0 0.0
    %450 = vmatprep.subr.mxu0 0.0
    %451 = vmatpush2.msra.mxu0 0.0
    %452 = vmatprep.mubr.f32.mxu0 0.0
    %453 = vmatmul.mubr.f32.gmra.mxu0 %v386
    %v454 = vpop.f32.mrf.mxu0
    %v455 = vadd.f32 0.0, %v454
    %v456 = vpop.f32.mrf.mxu0
    %457 = vdwg.mxu0
    %v459 = vrot.slane %v455, 6
    %v461 = vadd.f32 %v176, %v459
    %v462 = vmul.f32 %v461, 0.5
    %v463 = vtanh.pop %v462
    %v464 = vadd.f32 %v463, 1.0
    %v465 = vmul.f32 %v464, 0.5
    %v466 = vtanh.pop %v461
    %v468 = vrot.slane %v274, 6
    %v470 = vmul.f32 %v465, %v468
    %472 = vrot.lane.b32.xlu0 %v466, 32
    %v473 = vpop.permute.xlu0 %472
    %v475 = vmul.f32 %v465, %v473
    %477 = vrot.lane.b32.xlu0 %v475, 32
    %v478 = vpop.permute.xlu0 %477
    %v480 = vadd.f32 %v470, %v478
    %v481 = vtanh.pop %v480
    %483 = vrot.lane.b32.xlu0 %v481, 32
    %v484 = vpop.permute.xlu0 %483
    %v486 = vmul.f32 %v465, %v484
    %488 = vrot.lane.b32.xlu0 %v486, 64
    %v489 = vpop.permute.xlu0 %488
    %v492 = vrot.slane %v385, 6
    %493 = vrot.lane.b32.xlu0 %v492, 96
    %v494 = vpop.permute.xlu0 %493
    %v496 = vsel %vm184, %v489, %v494
    %v498 = vrot.slane %v496, 2
    %v499 = vsel %vm290, %v498, 0
    %501 = vmatprep.subr.mxu0 0.0
    %502 = vmatpush1.msra.mxu0 0.0
    %503 = vmatprep.subr.mxu0 0.0
    %504 = vmatpush1.msra.mxu0 0.0
    %505 = vmatprep.subr.mxu0 0.0
    %506 = vmatpush1.msra.mxu0 0.0
    %507 = vmatprep.subr.mxu0 0.0
    %508 = vmatpush1.msra.mxu0 0.0
    %509 = vmatprep.subr.mxu0 0.0
    %510 = vmatpush1.msra.mxu0 0.0
    %511 = vmatprep.subr.mxu0 0.0
    %512 = vmatpush1.msra.mxu0 0.0
    %513 = vmatprep.subr.mxu0 0.0
    %514 = vmatpush1.msra.mxu0 0.0
    %515 = vmatprep.subr.mxu0 0.0
    %516 = vmatpush1.msra.mxu0 0.0
    %517 = vmatprep.subr.mxu0 0.0
    %518 = vmatpush1.msra.mxu0 %v86
    %519 = vmatprep.subr.mxu0 0.0
    %520 = vmatpush1.msra.mxu0 %v85
    %521 = vmatprep.subr.mxu0 0.0
    %522 = vmatpush1.msra.mxu0 %v84
    %523 = vmatprep.subr.mxu0 0.0
    %524 = vmatpush1.msra.mxu0 %v83
    %525 = vmatprep.subr.mxu0 0.0
    %526 = vmatpush1.msra.mxu0 %v82
    %527 = vmatprep.subr.mxu0 0.0
    %528 = vmatpush1.msra.mxu0 %v81
    %529 = vmatprep.subr.mxu0 0.0
    %530 = vmatpush1.msra.mxu0 %v80
    %531 = vmatprep.subr.mxu0 0.0
    %532 = vmatpush1.msra.mxu0 %v79
    %533 = vmatprep.subr.mxu0 0.0
    %534 = vmatpush2.msra.mxu0 0.0
    %535 = vmatprep.subr.mxu0 0.0
    %536 = vmatpush2.msra.mxu0 0.0
    %537 = vmatprep.subr.mxu0 0.0
    %538 = vmatpush2.msra.mxu0 0.0
    %539 = vmatprep.subr.mxu0 0.0
    %540 = vmatpush2.msra.mxu0 0.0
    %541 = vmatprep.subr.mxu0 0.0
    %542 = vmatpush2.msra.mxu0 0.0
    %543 = vmatprep.subr.mxu0 0.0
    %544 = vmatpush2.msra.mxu0 0.0
    %545 = vmatprep.subr.mxu0 0.0
    %546 = vmatpush2.msra.mxu0 0.0
    %547 = vmatprep.subr.mxu0 0.0
    %548 = vmatpush2.msra.mxu0 0.0
    %549 = vmatprep.subr.mxu0 0.0
    %550 = vmatpush2.msra.mxu0 0.0
    %551 = vmatprep.subr.mxu0 0.0
    %552 = vmatpush2.msra.mxu0 0.0
    %553 = vmatprep.subr.mxu0 0.0
    %554 = vmatpush2.msra.mxu0 0.0
    %555 = vmatprep.subr.mxu0 0.0
    %556 = vmatpush2.msra.mxu0 0.0
    %557 = vmatprep.subr.mxu0 0.0
    %558 = vmatpush2.msra.mxu0 0.0
    %559 = vmatprep.subr.mxu0 0.0
    %560 = vmatpush2.msra.mxu0 0.0
    %561 = vmatprep.subr.mxu0 0.0
    %562 = vmatpush2.msra.mxu0 0.0
    %563 = vmatprep.subr.mxu0 0.0
    %564 = vmatpush2.msra.mxu0 0.0
    %565 = vmatprep.mubr.f32.mxu0 0.0
    %566 = vmatmul.mubr.f32.gmra.mxu0 %v499
    %v567 = vpop.f32.mrf.mxu0
    %v568 = vadd.f32 %v289, %v567
    %v569 = vpop.f32.mrf.mxu0
    %570 = vdwg.mxu0
    %v571 = vmul.f32 %v568, 0.5
    %v572 = vtanh.pop %v571
    %v573 = vadd.f32 %v572, 1.0
    %v574 = vmul.f32 %v573, 0.5
    %v575 = vtanh.pop %v568
    %v576 = vmul.f32 %v574, %v379
    %578 = vrot.lane.b32.xlu0 %v575, 32
    %v579 = vpop.permute.xlu0 %578
    %v581 = vmul.f32 %v574, %v579
    %583 = vrot.lane.b32.xlu0 %v581, 32
    %v584 = vpop.permute.xlu0 %583
    %v586 = vadd.f32 %v576, %v584
    %v587 = vtanh.pop %v586
    %589 = vrot.lane.b32.xlu0 %v587, 32
    %v590 = vpop.permute.xlu0 %589
    %v592 = vmul.f32 %v574, %v590
    %v593 = vrot.slane %v486, 2
    %594 = vrot.lane.b32.xlu0 %v593, 64
    %v595 = vpop.permute.xlu0 %594
    %v596 = vsel %vm184, %v595, 0
    %598 = vmatprep.subr.mxu0 0.0
    %599 = vmatpush1.msra.mxu0 0.0
    %600 = vmatprep.subr.mxu0 0.0
    %601 = vmatpush1.msra.mxu0 0.0
    %602 = vmatprep.subr.mxu0 0.0
    %603 = vmatpush1.msra.mxu0 0.0
    %604 = vmatprep.subr.mxu0 0.0
    %605 = vmatpush1.msra.mxu0 0.0
    %606 = vmatprep.subr.mxu0 0.0
    %607 = vmatpush1.msra.mxu0 0.0
    %608 = vmatprep.subr.mxu0 0.0
    %609 = vmatpush1.msra.mxu0 0.0
    %610 = vmatprep.subr.mxu0 0.0
    %611 = vmatpush1.msra.mxu0 0.0
    %612 = vmatprep.subr.mxu0 0.0
    %613 = vmatpush1.msra.mxu0 0.0
    %614 = vmatprep.subr.mxu0 0.0
    %615 = vmatpush1.msra.mxu0 0.0
    %616 = vmatprep.subr.mxu0 0.0
    %617 = vmatpush1.msra.mxu0 0.0
    %618 = vmatprep.subr.mxu0 0.0
    %619 = vmatpush1.msra.mxu0 0.0
    %620 = vmatprep.subr.mxu0 0.0
    %621 = vmatpush1.msra.mxu0 0.0
    %622 = vmatprep.subr.mxu0 0.0
    %623 = vmatpush1.msra.mxu0 %v78
    %624 = vmatprep.subr.mxu0 0.0
    %625 = vmatpush1.msra.mxu0 %v77
    %626 = vmatprep.subr.mxu0 0.0
    %627 = vmatpush1.msra.mxu0 %v76
    %628 = vmatprep.subr.mxu0 0.0
    %629 = vmatpush1.msra.mxu0 %v75
    %630 = vmatprep.subr.mxu0 0.0
    %631 = vmatpush2.msra.mxu0 0.0
    %632 = vmatprep.subr.mxu0 0.0
    %633 = vmatpush2.msra.mxu0 0.0
    %634 = vmatprep.subr.mxu0 0.0
    %635 = vmatpush2.msra.mxu0 0.0
    %636 = vmatprep.subr.mxu0 0.0
    %637 = vmatpush2.msra.mxu0 0.0
    %638 = vmatprep.subr.mxu0 0.0
    %639 = vmatpush2.msra.mxu0 0.0
    %640 = vmatprep.subr.mxu0 0.0
    %641 = vmatpush2.msra.mxu0 0.0
    %642 = vmatprep.subr.mxu0 0.0
    %643 = vmatpush2.msra.mxu0 0.0
    %644 = vmatprep.subr.mxu0 0.0
    %645 = vmatpush2.msra.mxu0 0.0
    %646 = vmatprep.subr.mxu0 0.0
    %647 = vmatpush2.msra.mxu0 0.0
    %648 = vmatprep.subr.mxu0 0.0
    %649 = vmatpush2.msra.mxu0 0.0
    %650 = vmatprep.subr.mxu0 0.0
    %651 = vmatpush2.msra.mxu0 0.0
    %652 = vmatprep.subr.mxu0 0.0
    %653 = vmatpush2.msra.mxu0 0.0
    %654 = vmatprep.subr.mxu0 0.0
    %655 = vmatpush2.msra.mxu0 0.0
    %656 = vmatprep.subr.mxu0 0.0
    %657 = vmatpush2.msra.mxu0 0.0
    %658 = vmatprep.subr.mxu0 0.0
    %659 = vmatpush2.msra.mxu0 0.0
    %660 = vmatprep.subr.mxu0 0.0
    %661 = vmatpush2.msra.mxu0 0.0
    %662 = vmatprep.mubr.f32.mxu0 0.0
    %663 = vmatmul.mubr.f32.gmra.mxu0 %v596
    %v664 = vpop.f32.mrf.mxu0
    %v665 = vadd.f32 0.0, %v664
    %v666 = vpop.f32.mrf.mxu0
    %667 = vdwg.mxu0
    %v669 = vrot.slane %v665, 4
    %v671 = vadd.f32 %v176, %v669
    %v672 = vmul.f32 %v671, 0.5
    %v673 = vtanh.pop %v672
    %v674 = vadd.f32 %v673, 1.0
    %v675 = vmul.f32 %v674, 0.5
    %v676 = vtanh.pop %v671
    %v678 = vrot.slane %v480, 6
    %v680 = vmul.f32 %v675, %v678
    %682 = vrot.lane.b32.xlu0 %v676, 32
    %v683 = vpop.permute.xlu0 %682
    %v685 = vmul.f32 %v675, %v683
    %687 = vrot.lane.b32.xlu0 %v685, 32
    %v688 = vpop.permute.xlu0 %687
    %v690 = vadd.f32 %v680, %v688
    %v691 = vtanh.pop %v690
    %693 = vrot.lane.b32.xlu0 %v691, 32
    %v694 = vpop.permute.xlu0 %693
    %v696 = vmul.f32 %v675, %v694
    %698 = vrot.lane.b32.xlu0 %v696, 64
    %v699 = vpop.permute.xlu0 %698
    %v702 = vrot.slane %v592, 4
    %703 = vrot.lane.b32.xlu0 %v702, 96
    %v704 = vpop.permute.xlu0 %703
    %v706 = vsel %vm184, %v699, %v704
    %v708 = vrot.slane %v706, 4
    %v709 = vsel %vm290, %v708, 0
    %711 = vmatprep.subr.mxu0 0.0
    %712 = vmatpush1.msra.mxu0 0.0
    %713 = vmatprep.subr.mxu0 0.0
    %714 = vmatpush1.msra.mxu0 0.0
    %715 = vmatprep.subr.mxu0 0.0
    %716 = vmatpush1.msra.mxu0 0.0
    %717 = vmatprep.subr.mxu0 0.0
    %718 = vmatpush1.msra.mxu0 0.0
    %719 = vmatprep.subr.mxu0 0.0
    %720 = vmatpush1.msra.mxu0 0.0
    %721 = vmatprep.subr.mxu0 0.0
    %722 = vmatpush1.msra.mxu0 0.0
    %723 = vmatprep.subr.mxu0 0.0
    %724 = vmatpush1.msra.mxu0 0.0
    %725 = vmatprep.subr.mxu0 0.0
    %726 = vmatpush1.msra.mxu0 0.0
    %727 = vmatprep.subr.mxu0 0.0
    %728 = vmatpush1.msra.mxu0 %v86
    %729 = vmatprep.subr.mxu0 0.0
    %730 = vmatpush1.msra.mxu0 %v85
    %731 = vmatprep.subr.mxu0 0.0
    %732 = vmatpush1.msra.mxu0 %v84
    %733 = vmatprep.subr.mxu0 0.0
    %734 = vmatpush1.msra.mxu0 %v83
    %735 = vmatprep.subr.mxu0 0.0
    %736 = vmatpush1.msra.mxu0 %v82
    %737 = vmatprep.subr.mxu0 0.0
    %738 = vmatpush1.msra.mxu0 %v81
    %739 = vmatprep.subr.mxu0 0.0
    %740 = vmatpush1.msra.mxu0 %v80
    %741 = vmatprep.subr.mxu0 0.0
    %742 = vmatpush1.msra.mxu0 %v79
    %743 = vmatprep.subr.mxu0 0.0
    %744 = vmatpush2.msra.mxu0 0.0
    %745 = vmatprep.subr.mxu0 0.0
    %746 = vmatpush2.msra.mxu0 0.0
    %747 = vmatprep.subr.mxu0 0.0
    %748 = vmatpush2.msra.mxu0 0.0
    %749 = vmatprep.subr.mxu0 0.0
    %750 = vmatpush2.msra.mxu0 0.0
    %751 = vmatprep.subr.mxu0 0.0
    %752 = vmatpush2.msra.mxu0 0.0
    %753 = vmatprep.subr.mxu0 0.0
    %754 = vmatpush2.msra.mxu0 0.0
    %755 = vmatprep.subr.mxu0 0.0
    %756 = vmatpush2.msra.mxu0 0.0
    %757 = vmatprep.subr.mxu0 0.0
    %758 = vmatpush2.msra.mxu0 0.0
    %759 = vmatprep.subr.mxu0 0.0
    %760 = vmatpush2.msra.mxu0 0.0
    %761 = vmatprep.subr.mxu0 0.0
    %762 = vmatpush2.msra.mxu0 0.0
    %763 = vmatprep.subr.mxu0 0.0
    %764 = vmatpush2.msra.mxu0 0.0
    %765 = vmatprep.subr.mxu0 0.0
    %766 = vmatpush2.msra.mxu0 0.0
    %767 = vmatprep.subr.mxu0 0.0
    %768 = vmatpush2.msra.mxu0 0.0
    %769 = vmatprep.subr.mxu0 0.0
    %770 = vmatpush2.msra.mxu0 0.0
    %771 = vmatprep.subr.mxu0 0.0
    %772 = vmatpush2.msra.mxu0 0.0
    %773 = vmatprep.subr.mxu0 0.0
    %774 = vmatpush2.msra.mxu0 0.0
    %775 = vmatprep.mubr.f32.mxu0 0.0
    %776 = vmatmul.mubr.f32.gmra.mxu0 %v709
    %v777 = vpop.f32.mrf.mxu0
    %v778 = vadd.f32 %v289, %v777
    %v779 = vpop.f32.mrf.mxu0
    %780 = vdwg.mxu0
    %v781 = vmul.f32 %v778, 0.5
    %v782 = vtanh.pop %v781
    %v783 = vadd.f32 %v782, 1.0
    %v784 = vmul.f32 %v783, 0.5
    %v785 = vtanh.pop %v778
    %v786 = vmul.f32 %v784, %v586
    %788 = vrot.lane.b32.xlu0 %v785, 32
    %v789 = vpop.permute.xlu0 %788
    %v791 = vmul.f32 %v784, %v789
    %793 = vrot.lane.b32.xlu0 %v791, 32
    %v794 = vpop.permute.xlu0 %793
    %v796 = vadd.f32 %v786, %v794
    %v797 = vtanh.pop %v796
    %799 = vrot.lane.b32.xlu0 %v797, 32
    %v800 = vpop.permute.xlu0 %799
    %v802 = vmul.f32 %v784, %v800
    %v803 = vrot.slane %v696, 4
    %804 = vrot.lane.b32.xlu0 %v803, 64
    %v805 = vpop.permute.xlu0 %804
    %v806 = vsel %vm184, %v805, 0
    %808 = vmatprep.subr.mxu0 0.0
    %809 = vmatpush1.msra.mxu0 0.0
    %810 = vmatprep.subr.mxu0 0.0
    %811 = vmatpush1.msra.mxu0 0.0
    %812 = vmatprep.subr.mxu0 0.0
    %813 = vmatpush1.msra.mxu0 0.0
    %814 = vmatprep.subr.mxu0 0.0
    %815 = vmatpush1.msra.mxu0 0.0
    %816 = vmatprep.subr.mxu0 0.0
    %817 = vmatpush1.msra.mxu0 0.0
    %818 = vmatprep.subr.mxu0 0.0
    %819 = vmatpush1.msra.mxu0 0.0
    %820 = vmatprep.subr.mxu0 0.0
    %821 = vmatpush1.msra.mxu0 0.0
    %822 = vmatprep.subr.mxu0 0.0
    %823 = vmatpush1.msra.mxu0 0.0
    %824 = vmatprep.subr.mxu0 0.0
    %825 = vmatpush1.msra.mxu0 0.0
    %826 = vmatprep.subr.mxu0 0.0
    %827 = vmatpush1.msra.mxu0 0.0
    %828 = vmatprep.subr.mxu0 0.0
    %829 = vmatpush1.msra.mxu0 0.0
    %830 = vmatprep.subr.mxu0 0.0
    %831 = vmatpush1.msra.mxu0 0.0
    %832 = vmatprep.subr.mxu0 0.0
    %833 = vmatpush1.msra.mxu0 %v78
    %834 = vmatprep.subr.mxu0 0.0
    %835 = vmatpush1.msra.mxu0 %v77
    %836 = vmatprep.subr.mxu0 0.0
    %837 = vmatpush1.msra.mxu0 %v76
    %838 = vmatprep.subr.mxu0 0.0
    %839 = vmatpush1.msra.mxu0 %v75
    %840 = vmatprep.subr.mxu0 0.0
    %841 = vmatpush2.msra.mxu0 0.0
    %842 = vmatprep.subr.mxu0 0.0
    %843 = vmatpush2.msra.mxu0 0.0
    %844 = vmatprep.subr.mxu0 0.0
    %845 = vmatpush2.msra.mxu0 0.0
    %846 = vmatprep.subr.mxu0 0.0
    %847 = vmatpush2.msra.mxu0 0.0
    %848 = vmatprep.subr.mxu0 0.0
    %849 = vmatpush2.msra.mxu0 0.0
    %850 = vmatprep.subr.mxu0 0.0
    %851 = vmatpush2.msra.mxu0 0.0
    %852 = vmatprep.subr.mxu0 0.0
    %853 = vmatpush2.msra.mxu0 0.0
    %854 = vmatprep.subr.mxu0 0.0
    %855 = vmatpush2.msra.mxu0 0.0
    %856 = vmatprep.subr.mxu0 0.0
    %857 = vmatpush2.msra.mxu0 0.0
    %858 = vmatprep.subr.mxu0 0.0
    %859 = vmatpush2.msra.mxu0 0.0
    %860 = vmatprep.subr.mxu0 0.0
    %861 = vmatpush2.msra.mxu0 0.0
    %862 = vmatprep.subr.mxu0 0.0
    %863 = vmatpush2.msra.mxu0 0.0
    %864 = vmatprep.subr.mxu0 0.0
    %865 = vmatpush2.msra.mxu0 0.0
    %866 = vmatprep.subr.mxu0 0.0
    %867 = vmatpush2.msra.mxu0 0.0
    %868 = vmatprep.subr.mxu0 0.0
    %869 = vmatpush2.msra.mxu0 0.0
    %870 = vmatprep.subr.mxu0 0.0
    %871 = vmatpush2.msra.mxu0 0.0
    %872 = vmatprep.mubr.f32.mxu0 0.0
    %873 = vmatmul.mubr.f32.gmra.mxu0 %v806
    %v874 = vpop.f32.mrf.mxu0
    %v875 = vadd.f32 0.0, %v874
    %v876 = vpop.f32.mrf.mxu0
    %877 = vdwg.mxu0
    %v879 = vrot.slane %v875, 2
    %v881 = vadd.f32 %v176, %v879
    %v882 = vmul.f32 %v881, 0.5
    %v883 = vtanh.pop %v882
    %v884 = vadd.f32 %v883, 1.0
    %v885 = vmul.f32 %v884, 0.5
    %v886 = vtanh.pop %v881
    %v888 = vrot.slane %v690, 6
    %v890 = vmul.f32 %v885, %v888
    %892 = vrot.lane.b32.xlu0 %v886, 32
    %v893 = vpop.permute.xlu0 %892
    %v895 = vmul.f32 %v885, %v893
    %897 = vrot.lane.b32.xlu0 %v895, 32
    %v898 = vpop.permute.xlu0 %897
    %v900 = vadd.f32 %v890, %v898
    %v901 = vtanh.pop %v900
    %903 = vrot.lane.b32.xlu0 %v901, 32
    %v904 = vpop.permute.xlu0 %903
    %v906 = vmul.f32 %v885, %v904
    %908 = vrot.lane.b32.xlu0 %v906, 64
    %v909 = vpop.permute.xlu0 %908
    %v912 = vrot.slane %v802, 2
    %913 = vrot.lane.b32.xlu0 %v912, 96
    %v914 = vpop.permute.xlu0 %913
    %v916 = vsel %vm184, %v909, %v914
    %v918 = vrot.slane %v916, 6
    %v919 = vsel %vm290, %v918, 0
    %921 = vmatprep.subr.mxu0 0.0
    %922 = vmatpush1.msra.mxu0 0.0
    %923 = vmatprep.subr.mxu0 0.0
    %924 = vmatpush1.msra.mxu0 0.0
    %925 = vmatprep.subr.mxu0 0.0
    %926 = vmatpush1.msra.mxu0 0.0
    %927 = vmatprep.subr.mxu0 0.0
    %928 = vmatpush1.msra.mxu0 0.0
    %929 = vmatprep.subr.mxu0 0.0
    %930 = vmatpush1.msra.mxu0 0.0
    %931 = vmatprep.subr.mxu0 0.0
    %932 = vmatpush1.msra.mxu0 0.0
    %933 = vmatprep.subr.mxu0 0.0
    %934 = vmatpush1.msra.mxu0 0.0
    %935 = vmatprep.subr.mxu0 0.0
    %936 = vmatpush1.msra.mxu0 0.0
    %937 = vmatprep.subr.mxu0 0.0
    %938 = vmatpush1.msra.mxu0 %v86
    %939 = vmatprep.subr.mxu0 0.0
    %940 = vmatpush1.msra.mxu0 %v85
    %941 = vmatprep.subr.mxu0 0.0
    %942 = vmatpush1.msra.mxu0 %v84
    %943 = vmatprep.subr.mxu0 0.0
    %944 = vmatpush1.msra.mxu0 %v83
    %945 = vmatprep.subr.mxu0 0.0
    %946 = vmatpush1.msra.mxu0 %v82
    %947 = vmatprep.subr.mxu0 0.0
    %948 = vmatpush1.msra.mxu0 %v81
    %949 = vmatprep.subr.mxu0 0.0
    %950 = vmatpush1.msra.mxu0 %v80
    %951 = vmatprep.subr.mxu0 0.0
    %952 = vmatpush1.msra.mxu0 %v79
    %953 = vmatprep.subr.mxu0 0.0
    %954 = vmatpush2.msra.mxu0 0.0
    %955 = vmatprep.subr.mxu0 0.0
    %956 = vmatpush2.msra.mxu0 0.0
    %957 = vmatprep.subr.mxu0 0.0
    %958 = vmatpush2.msra.mxu0 0.0
    %959 = vmatprep.subr.mxu0 0.0
    %960 = vmatpush2.msra.mxu0 0.0
    %961 = vmatprep.subr.mxu0 0.0
    %962 = vmatpush2.msra.mxu0 0.0
    %963 = vmatprep.subr.mxu0 0.0
    %964 = vmatpush2.msra.mxu0 0.0
    %965 = vmatprep.subr.mxu0 0.0
    %966 = vmatpush2.msra.mxu0 0.0
    %967 = vmatprep.subr.mxu0 0.0
    %968 = vmatpush2.msra.mxu0 0.0
    %969 = vmatprep.subr.mxu0 0.0
    %970 = vmatpush2.msra.mxu0 0.0
    %971 = vmatprep.subr.mxu0 0.0
    %972 = vmatpush2.msra.mxu0 0.0
    %973 = vmatprep.subr.mxu0 0.0
    %974 = vmatpush2.msra.mxu0 0.0
    %975 = vmatprep.subr.mxu0 0.0
    %976 = vmatpush2.msra.mxu0 0.0
    %977 = vmatprep.subr.mxu0 0.0
    %978 = vmatpush2.msra.mxu0 0.0
    %979 = vmatprep.subr.mxu0 0.0
    %980 = vmatpush2.msra.mxu0 0.0
    %981 = vmatprep.subr.mxu0 0.0
    %982 = vmatpush2.msra.mxu0 0.0
    %983 = vmatprep.subr.mxu0 0.0
    %984 = vmatpush2.msra.mxu0 0.0
    %985 = vmatprep.mubr.f32.mxu0 0.0
    %986 = vmatmul.mubr.f32.gmra.mxu0 %v919
    %v987 = vpop.f32.mrf.mxu0
    %v988 = vadd.f32 %v289, %v987
    %v989 = vpop.f32.mrf.mxu0
    %990 = vdwg.mxu0
    %v991 = vmul.f32 %v988, 0.5
    %v992 = vtanh.pop %v991
    %v993 = vadd.f32 %v992, 1.0
    %v994 = vmul.f32 %v993, 0.5
    %v995 = vtanh.pop %v988
    %v996 = vmul.f32 %v994, %v796
    %998 = vrot.lane.b32.xlu0 %v995, 32
    %v999 = vpop.permute.xlu0 %998
    %v1001 = vmul.f32 %v994, %v999
    %1003 = vrot.lane.b32.xlu0 %v1001, 32
    %v1004 = vpop.permute.xlu0 %1003
    %v1006 = vadd.f32 %v996, %v1004
    %v1007 = vtanh.pop %v1006
    %1009 = vrot.lane.b32.xlu0 %v1007, 32
    %v1010 = vpop.permute.xlu0 %1009
    %v1012 = vmul.f32 %v994, %v1010
    %v1013 = vrot.slane %v906, 6
    %1014 = vrot.lane.b32.xlu0 %v1013, 64
    %v1015 = vpop.permute.xlu0 %1014
    %v1016 = vsel %vm184, %v1015, 0
    %1018 = vmatprep.subr.mxu0 0.0
    %1019 = vmatpush1.msra.mxu0 0.0
    %1020 = vmatprep.subr.mxu0 0.0
    %1021 = vmatpush1.msra.mxu0 0.0
    %1022 = vmatprep.subr.mxu0 0.0
    %1023 = vmatpush1.msra.mxu0 0.0
    %1024 = vmatprep.subr.mxu0 0.0
    %1025 = vmatpush1.msra.mxu0 0.0
    %1026 = vmatprep.subr.mxu0 0.0
    %1027 = vmatpush1.msra.mxu0 0.0
    %1028 = vmatprep.subr.mxu0 0.0
    %1029 = vmatpush1.msra.mxu0 0.0
    %1030 = vmatprep.subr.mxu0 0.0
    %1031 = vmatpush1.msra.mxu0 0.0
    %1032 = vmatprep.subr.mxu0 0.0
    %1033 = vmatpush1.msra.mxu0 0.0
    %1034 = vmatprep.subr.mxu0 0.0
    %1035 = vmatpush1.msra.mxu0 0.0
    %1036 = vmatprep.subr.mxu0 0.0
    %1037 = vmatpush1.msra.mxu0 0.0
    %1038 = vmatprep.subr.mxu0 0.0
    %1039 = vmatpush1.msra.mxu0 0.0
    %1040 = vmatprep.subr.mxu0 0.0
    %1041 = vmatpush1.msra.mxu0 0.0
    %1042 = vmatprep.subr.mxu0 0.0
    %1043 = vmatpush1.msra.mxu0 %v78
    %1044 = vmatprep.subr.mxu0 0.0
    %1045 = vmatpush1.msra.mxu0 %v77
    %1046 = vmatprep.subr.mxu0 0.0
    %1047 = vmatpush1.msra.mxu0 %v76
    %1048 = vmatprep.subr.mxu0 0.0
    %1049 = vmatpush1.msra.mxu0 %v75
    %1050 = vmatprep.subr.mxu0 0.0
    %1051 = vmatpush2.msra.mxu0 0.0
    %1052 = vmatprep.subr.mxu0 0.0
    %1053 = vmatpush2.msra.mxu0 0.0
    %1054 = vmatprep.subr.mxu0 0.0
    %1055 = vmatpush2.msra.mxu0 0.0
    %1056 = vmatprep.subr.mxu0 0.0
    %1057 = vmatpush2.msra.mxu0 0.0
    %1058 = vmatprep.subr.mxu0 0.0
    %1059 = vmatpush2.msra.mxu0 0.0
    %1060 = vmatprep.subr.mxu0 0.0
    %1061 = vmatpush2.msra.mxu0 0.0
    %1062 = vmatprep.subr.mxu0 0.0
    %1063 = vmatpush2.msra.mxu0 0.0
    %1064 = vmatprep.subr.mxu0 0.0
    %1065 = vmatpush2.msra.mxu0 0.0
    %1066 = vmatprep.subr.mxu0 0.0
    %1067 = vmatpush2.msra.mxu0 0.0
    %1068 = vmatprep.subr.mxu0 0.0
    %1069 = vmatpush2.msra.mxu0 0.0
    %1070 = vmatprep.subr.mxu0 0.0
    %1071 = vmatpush2.msra.mxu0 0.0
    %1072 = vmatprep.subr.mxu0 0.0
    %1073 = vmatpush2.msra.mxu0 0.0
    %1074 = vmatprep.subr.mxu0 0.0
    %1075 = vmatpush2.msra.mxu0 0.0
    %1076 = vmatprep.subr.mxu0 0.0
    %1077 = vmatpush2.msra.mxu0 0.0
    %1078 = vmatprep.subr.mxu0 0.0
    %1079 = vmatpush2.msra.mxu0 0.0
    %1080 = vmatprep.subr.mxu0 0.0
    %1081 = vmatpush2.msra.mxu0 0.0
    %1082 = vmatprep.mubr.f32.mxu0 0.0
    %1083 = vmatmul.mubr.f32.gmra.mxu0 %v1016
    %v1084 = vpop.f32.mrf.mxu0
    %v1085 = vadd.f32 0.0, %v1084
    %v1086 = vpop.f32.mrf.mxu0
    %1087 = vdwg.mxu0
    %v1088 = vadd.f32 %v181, %v1085
    %v1089 = vmul.f32 %v1088, 0.5
    %v1090 = vtanh.pop %v1089
    %v1091 = vadd.f32 %v1090, 1.0
    %v1092 = vmul.f32 %v1091, 0.5
    %v1093 = vtanh.pop %v1088
    %v1095 = vrot.slane %v900, 6
    %v1097 = vmul.f32 %v1092, %v1095
    %1099 = vrot.lane.b32.xlu0 %v1093, 32
    %v1100 = vpop.permute.xlu0 %1099
    %v1102 = vmul.f32 %v1092, %v1100
    %1104 = vrot.lane.b32.xlu0 %v1102, 32
    %v1105 = vpop.permute.xlu0 %1104
    %v1107 = vadd.f32 %v1097, %v1105
    %v1108 = vtanh.pop %v1107
    %1110 = vrot.lane.b32.xlu0 %v1108, 32
    %v1111 = vpop.permute.xlu0 %1110
    %v1113 = vmul.f32 %v1092, %v1111
    %1115 = vrot.lane.b32.xlu0 %v1113, 64
    %v1116 = vpop.permute.xlu0 %1115
    %1119 = vrot.lane.b32.xlu0 %v1012, 96
    %v1120 = vpop.permute.xlu0 %1119
    %v1122 = vsel %vm184, %v1116, %v1120
    %v1124 = vsel %vm290, %v1122, 0
    %1126 = vmatprep.subr.mxu0 0.0
    %1127 = vmatpush1.msra.mxu0 0.0
    %1128 = vmatprep.subr.mxu0 0.0
    %1129 = vmatpush1.msra.mxu0 0.0
    %1130 = vmatprep.subr.mxu0 0.0
    %1131 = vmatpush1.msra.mxu0 0.0
    %1132 = vmatprep.subr.mxu0 0.0
    %1133 = vmatpush1.msra.mxu0 0.0
    %1134 = vmatprep.subr.mxu0 0.0
    %1135 = vmatpush1.msra.mxu0 0.0
    %1136 = vmatprep.subr.mxu0 0.0
    %1137 = vmatpush1.msra.mxu0 0.0
    %1138 = vmatprep.subr.mxu0 0.0
    %1139 = vmatpush1.msra.mxu0 0.0
    %1140 = vmatprep.subr.mxu0 0.0
    %1141 = vmatpush1.msra.mxu0 0.0
    %1142 = vmatprep.subr.mxu0 0.0
    %1143 = vmatpush1.msra.mxu0 %v86
    %1144 = vmatprep.subr.mxu0 0.0
    %1145 = vmatpush1.msra.mxu0 %v85
    %1146 = vmatprep.subr.mxu0 0.0
    %1147 = vmatpush1.msra.mxu0 %v84
    %1148 = vmatprep.subr.mxu0 0.0
    %1149 = vmatpush1.msra.mxu0 %v83
    %1150 = vmatprep.subr.mxu0 0.0
    %1151 = vmatpush1.msra.mxu0 %v82
    %1152 = vmatprep.subr.mxu0 0.0
    %1153 = vmatpush1.msra.mxu0 %v81
    %1154 = vmatprep.subr.mxu0 0.0
    %1155 = vmatpush1.msra.mxu0 %v80
    %1156 = vmatprep.subr.mxu0 0.0
    %1157 = vmatpush1.msra.mxu0 %v79
    %1158 = vmatprep.subr.mxu0 0.0
    %1159 = vmatpush2.msra.mxu0 0.0
    %1160 = vmatprep.subr.mxu0 0.0
    %1161 = vmatpush2.msra.mxu0 0.0
    %1162 = vmatprep.subr.mxu0 0.0
    %1163 = vmatpush2.msra.mxu0 0.0
    %1164 = vmatprep.subr.mxu0 0.0
    %1165 = vmatpush2.msra.mxu0 0.0
    %1166 = vmatprep.subr.mxu0 0.0
    %1167 = vmatpush2.msra.mxu0 0.0
    %1168 = vmatprep.subr.mxu0 0.0
    %1169 = vmatpush2.msra.mxu0 0.0
    %1170 = vmatprep.subr.mxu0 0.0
    %1171 = vmatpush2.msra.mxu0 0.0
    %1172 = vmatprep.subr.mxu0 0.0
    %1173 = vmatpush2.msra.mxu0 0.0
    %1174 = vmatprep.subr.mxu0 0.0
    %1175 = vmatpush2.msra.mxu0 0.0
    %1176 = vmatprep.subr.mxu0 0.0
    %1177 = vmatpush2.msra.mxu0 0.0
    %1178 = vmatprep.subr.mxu0 0.0
    %1179 = vmatpush2.msra.mxu0 0.0
    %1180 = vmatprep.subr.mxu0 0.0
    %1181 = vmatpush2.msra.mxu0 0.0
    %1182 = vmatprep.subr.mxu0 0.0
    %1183 = vmatpush2.msra.mxu0 0.0
    %1184 = vmatprep.subr.mxu0 0.0
    %1185 = vmatpush2.msra.mxu0 0.0
    %1186 = vmatprep.subr.mxu0 0.0
    %1187 = vmatpush2.msra.mxu0 0.0
    %1188 = vmatprep.subr.mxu0 0.0
    %1189 = vmatpush2.msra.mxu0 0.0
    %1190 = vmatprep.mubr.f32.mxu0 0.0
    %1191 = vmatmul.mubr.f32.gmra.mxu0 %v1124
    %v1192 = vpop.f32.mrf.mxu0
    %v1193 = vadd.f32 %v289, %v1192
    %v1194 = vpop.f32.mrf.mxu0
    %1195 = vdwg.mxu0
    %v1196 = vmul.f32 %v1193, 0.5
    %v1197 = vtanh.pop %v1196
    %v1198 = vadd.f32 %v1197, 1.0
    %v1199 = vmul.f32 %v1198, 0.5
    %v1200 = vtanh.pop %v1193
    %v1201 = vmul.f32 %v1199, %v1006
    %1203 = vrot.lane.b32.xlu0 %v1200, 32
    %v1204 = vpop.permute.xlu0 %1203
    %v1206 = vmul.f32 %v1199, %v1204
    %1208 = vrot.lane.b32.xlu0 %v1206, 32
    %v1209 = vpop.permute.xlu0 %1208
    %v1211 = vadd.f32 %v1201, %v1209
    %v1212 = vtanh.pop %v1211
    %1214 = vrot.lane.b32.xlu0 %v1212, 32
    %v1215 = vpop.permute.xlu0 %1214
    %v1217 = vmul.f32 %v1199, %v1215
    %v1218 = vsel %vm184, %v1116, 0
    %1220 = vmatprep.subr.mxu0 0.0
    %1221 = vmatpush1.msra.mxu0 0.0
    %1222 = vmatprep.subr.mxu0 0.0
    %1223 = vmatpush1.msra.mxu0 0.0
    %1224 = vmatprep.subr.mxu0 0.0
    %1225 = vmatpush1.msra.mxu0 0.0
    %1226 = vmatprep.subr.mxu0 0.0
    %1227 = vmatpush1.msra.mxu0 0.0
    %1228 = vmatprep.subr.mxu0 0.0
    %1229 = vmatpush1.msra.mxu0 0.0
    %1230 = vmatprep.subr.mxu0 0.0
    %1231 = vmatpush1.msra.mxu0 0.0
    %1232 = vmatprep.subr.mxu0 0.0
    %1233 = vmatpush1.msra.mxu0 0.0
    %1234 = vmatprep.subr.mxu0 0.0
    %1235 = vmatpush1.msra.mxu0 0.0
    %1236 = vmatprep.subr.mxu0 0.0
    %1237 = vmatpush1.msra.mxu0 0.0
    %1238 = vmatprep.subr.mxu0 0.0
    %1239 = vmatpush1.msra.mxu0 0.0
    %1240 = vmatprep.subr.mxu0 0.0
    %1241 = vmatpush1.msra.mxu0 0.0
    %1242 = vmatprep.subr.mxu0 0.0
    %1243 = vmatpush1.msra.mxu0 0.0
    %1244 = vmatprep.subr.mxu0 0.0
    %1245 = vmatpush1.msra.mxu0 %v78
    %1246 = vmatprep.subr.mxu0 0.0
    %1247 = vmatpush1.msra.mxu0 %v77
    %1248 = vmatprep.subr.mxu0 0.0
    %1249 = vmatpush1.msra.mxu0 %v76
    %1250 = vmatprep.subr.mxu0 0.0
    %1251 = vmatpush1.msra.mxu0 %v75
    %1252 = vmatprep.subr.mxu0 0.0
    %1253 = vmatpush2.msra.mxu0 0.0
    %1254 = vmatprep.subr.mxu0 0.0
    %1255 = vmatpush2.msra.mxu0 0.0
    %1256 = vmatprep.subr.mxu0 0.0
    %1257 = vmatpush2.msra.mxu0 0.0
    %1258 = vmatprep.subr.mxu0 0.0
    %1259 = vmatpush2.msra.mxu0 0.0
    %1260 = vmatprep.subr.mxu0 0.0
    %1261 = vmatpush2.msra.mxu0 0.0
    %1262 = vmatprep.subr.mxu0 0.0
    %1263 = vmatpush2.msra.mxu0 0.0
    %1264 = vmatprep.subr.mxu0 0.0
    %1265 = vmatpush2.msra.mxu0 0.0
    %1266 = vmatprep.subr.mxu0 0.0
    %1267 = vmatpush2.msra.mxu0 0.0
    %1268 = vmatprep.subr.mxu0 0.0
    %1269 = vmatpush2.msra.mxu0 0.0
    %1270 = vmatprep.subr.mxu0 0.0
    %1271 = vmatpush2.msra.mxu0 0.0
    %1272 = vmatprep.subr.mxu0 0.0
    %1273 = vmatpush2.msra.mxu0 0.0
    %1274 = vmatprep.subr.mxu0 0.0
    %1275 = vmatpush2.msra.mxu0 0.0
    %1276 = vmatprep.subr.mxu0 0.0
    %1277 = vmatpush2.msra.mxu0 0.0
    %1278 = vmatprep.subr.mxu0 0.0
    %1279 = vmatpush2.msra.mxu0 0.0
    %1280 = vmatprep.subr.mxu0 0.0
    %1281 = vmatpush2.msra.mxu0 0.0
    %1282 = vmatprep.subr.mxu0 0.0
    %1283 = vmatpush2.msra.mxu0 0.0
    %1284 = vmatprep.mubr.f32.mxu0 0.0
    %1285 = vmatmul.mubr.f32.gmra.mxu0 %v1218
    %v1286 = vpop.f32.mrf.mxu0
    %v1287 = vadd.f32 0.0, %v1286
    %v1288 = vpop.f32.mrf.mxu0
    %1289 = vdwg.mxu0
    %v1291 = vrot.slane %v1287, 6
    %v1293 = vadd.f32 %v181, %v1291
    %v1294 = vmul.f32 %v1293, 0.5
    %v1295 = vtanh.pop %v1294
    %v1296 = vadd.f32 %v1295, 1.0
    %v1297 = vmul.f32 %v1296, 0.5
    %v1298 = vtanh.pop %v1293
    %v1300 = vrot.slane %v1107, 6
    %v1302 = vmul.f32 %v1297, %v1300
    %1304 = vrot.lane.b32.xlu0 %v1298, 32
    %v1305 = vpop.permute.xlu0 %1304
    %v1307 = vmul.f32 %v1297, %v1305
    %1309 = vrot.lane.b32.xlu0 %v1307, 32
    %v1310 = vpop.permute.xlu0 %1309
    %v1312 = vadd.f32 %v1302, %v1310
    %v1313 = vtanh.pop %v1312
    %1315 = vrot.lane.b32.xlu0 %v1313, 32
    %v1316 = vpop.permute.xlu0 %1315
    %v1318 = vmul.f32 %v1297, %v1316
    %1320 = vrot.lane.b32.xlu0 %v1318, 64
    %v1321 = vpop.permute.xlu0 %1320
    %v1324 = vrot.slane %v1217, 6
    %1325 = vrot.lane.b32.xlu0 %v1324, 96
    %v1326 = vpop.permute.xlu0 %1325
    %v1328 = vsel %vm184, %v1321, %v1326
    %v1330 = vrot.slane %v1328, 2
    %v1331 = vsel %vm290, %v1330, 0
    %1333 = vmatprep.subr.mxu0 0.0
    %1334 = vmatpush1.msra.mxu0 0.0
    %1335 = vmatprep.subr.mxu0 0.0
    %1336 = vmatpush1.msra.mxu0 0.0
    %1337 = vmatprep.subr.mxu0 0.0
    %1338 = vmatpush1.msra.mxu0 0.0
    %1339 = vmatprep.subr.mxu0 0.0
    %1340 = vmatpush1.msra.mxu0 0.0
    %1341 = vmatprep.subr.mxu0 0.0
    %1342 = vmatpush1.msra.mxu0 0.0
    %1343 = vmatprep.subr.mxu0 0.0
    %1344 = vmatpush1.msra.mxu0 0.0
    %1345 = vmatprep.subr.mxu0 0.0
    %1346 = vmatpush1.msra.mxu0 0.0
    %1347 = vmatprep.subr.mxu0 0.0
    %1348 = vmatpush1.msra.mxu0 0.0
    %1349 = vmatprep.subr.mxu0 0.0
    %1350 = vmatpush1.msra.mxu0 %v86
    %1351 = vmatprep.subr.mxu0 0.0
    %1352 = vmatpush1.msra.mxu0 %v85
    %1353 = vmatprep.subr.mxu0 0.0
    %1354 = vmatpush1.msra.mxu0 %v84
    %1355 = vmatprep.subr.mxu0 0.0
    %1356 = vmatpush1.msra.mxu0 %v83
    %1357 = vmatprep.subr.mxu0 0.0
    %1358 = vmatpush1.msra.mxu0 %v82
    %1359 = vmatprep.subr.mxu0 0.0
    %1360 = vmatpush1.msra.mxu0 %v81
    %1361 = vmatprep.subr.mxu0 0.0
    %1362 = vmatpush1.msra.mxu0 %v80
    %1363 = vmatprep.subr.mxu0 0.0
    %1364 = vmatpush1.msra.mxu0 %v79
    %1365 = vmatprep.subr.mxu0 0.0
    %1366 = vmatpush2.msra.mxu0 0.0
    %1367 = vmatprep.subr.mxu0 0.0
    %1368 = vmatpush2.msra.mxu0 0.0
    %1369 = vmatprep.subr.mxu0 0.0
    %1370 = vmatpush2.msra.mxu0 0.0
    %1371 = vmatprep.subr.mxu0 0.0
    %1372 = vmatpush2.msra.mxu0 0.0
    %1373 = vmatprep.subr.mxu0 0.0
    %1374 = vmatpush2.msra.mxu0 0.0
    %1375 = vmatprep.subr.mxu0 0.0
    %1376 = vmatpush2.msra.mxu0 0.0
    %1377 = vmatprep.subr.mxu0 0.0
    %1378 = vmatpush2.msra.mxu0 0.0
    %1379 = vmatprep.subr.mxu0 0.0
    %1380 = vmatpush2.msra.mxu0 0.0
    %1381 = vmatprep.subr.mxu0 0.0
    %1382 = vmatpush2.msra.mxu0 0.0
    %1383 = vmatprep.subr.mxu0 0.0
    %1384 = vmatpush2.msra.mxu0 0.0
    %1385 = vmatprep.subr.mxu0 0.0
    %1386 = vmatpush2.msra.mxu0 0.0
    %1387 = vmatprep.subr.mxu0 0.0
    %1388 = vmatpush2.msra.mxu0 0.0
    %1389 = vmatprep.subr.mxu0 0.0
    %1390 = vmatpush2.msra.mxu0 0.0
    %1391 = vmatprep.subr.mxu0 0.0
    %1392 = vmatpush2.msra.mxu0 0.0
    %1393 = vmatprep.subr.mxu0 0.0
    %1394 = vmatpush2.msra.mxu0 0.0
    %1395 = vmatprep.subr.mxu0 0.0
    %1396 = vmatpush2.msra.mxu0 0.0
    %1397 = vmatprep.mubr.f32.mxu0 0.0
    %1398 = vmatmul.mubr.f32.gmra.mxu0 %v1331
    %v1399 = vpop.f32.mrf.mxu0
    %v1400 = vadd.f32 %v289, %v1399
    %v1401 = vpop.f32.mrf.mxu0
    %1402 = vdwg.mxu0
    %v1403 = vmul.f32 %v1400, 0.5
    %v1404 = vtanh.pop %v1403
    %v1405 = vadd.f32 %v1404, 1.0
    %v1406 = vmul.f32 %v1405, 0.5
    %v1407 = vtanh.pop %v1400
    %v1408 = vmul.f32 %v1406, %v1211
    %1410 = vrot.lane.b32.xlu0 %v1407, 32
    %v1411 = vpop.permute.xlu0 %1410
    %v1413 = vmul.f32 %v1406, %v1411
    %1415 = vrot.lane.b32.xlu0 %v1413, 32
    %v1416 = vpop.permute.xlu0 %1415
    %v1418 = vadd.f32 %v1408, %v1416
    %v1419 = vtanh.pop %v1418
    %1421 = vrot.lane.b32.xlu0 %v1419, 32
    %v1422 = vpop.permute.xlu0 %1421
    %v1424 = vmul.f32 %v1406, %v1422
    %v1425 = vrot.slane %v1318, 2
    %1426 = vrot.lane.b32.xlu0 %v1425, 64
    %v1427 = vpop.permute.xlu0 %1426
    %v1428 = vsel %vm184, %v1427, 0
    %1430 = vmatprep.subr.mxu0 0.0
    %1431 = vmatpush1.msra.mxu0 0.0
    %1432 = vmatprep.subr.mxu0 0.0
    %1433 = vmatpush1.msra.mxu0 0.0
    %1434 = vmatprep.subr.mxu0 0.0
    %1435 = vmatpush1.msra.mxu0 0.0
    %1436 = vmatprep.subr.mxu0 0.0
    %1437 = vmatpush1.msra.mxu0 0.0
    %1438 = vmatprep.subr.mxu0 0.0
    %1439 = vmatpush1.msra.mxu0 0.0
    %1440 = vmatprep.subr.mxu0 0.0
    %1441 = vmatpush1.msra.mxu0 0.0
    %1442 = vmatprep.subr.mxu0 0.0
    %1443 = vmatpush1.msra.mxu0 0.0
    %1444 = vmatprep.subr.mxu0 0.0
    %1445 = vmatpush1.msra.mxu0 0.0
    %1446 = vmatprep.subr.mxu0 0.0
    %1447 = vmatpush1.msra.mxu0 0.0
    %1448 = vmatprep.subr.mxu0 0.0
    %1449 = vmatpush1.msra.mxu0 0.0
    %1450 = vmatprep.subr.mxu0 0.0
    %1451 = vmatpush1.msra.mxu0 0.0
    %1452 = vmatprep.subr.mxu0 0.0
    %1453 = vmatpush1.msra.mxu0 0.0
    %1454 = vmatprep.subr.mxu0 0.0
    %1455 = vmatpush1.msra.mxu0 %v78
    %1456 = vmatprep.subr.mxu0 0.0
    %1457 = vmatpush1.msra.mxu0 %v77
    %1458 = vmatprep.subr.mxu0 0.0
    %1459 = vmatpush1.msra.mxu0 %v76
    %1460 = vmatprep.subr.mxu0 0.0
    %1461 = vmatpush1.msra.mxu0 %v75
    %1462 = vmatprep.subr.mxu0 0.0
    %1463 = vmatpush2.msra.mxu0 0.0
    %1464 = vmatprep.subr.mxu0 0.0
    %1465 = vmatpush2.msra.mxu0 0.0
    %1466 = vmatprep.subr.mxu0 0.0
    %1467 = vmatpush2.msra.mxu0 0.0
    %1468 = vmatprep.subr.mxu0 0.0
    %1469 = vmatpush2.msra.mxu0 0.0
    %1470 = vmatprep.subr.mxu0 0.0
    %1471 = vmatpush2.msra.mxu0 0.0
    %1472 = vmatprep.subr.mxu0 0.0
    %1473 = vmatpush2.msra.mxu0 0.0
    %1474 = vmatprep.subr.mxu0 0.0
    %1475 = vmatpush2.msra.mxu0 0.0
    %1476 = vmatprep.subr.mxu0 0.0
    %1477 = vmatpush2.msra.mxu0 0.0
    %1478 = vmatprep.subr.mxu0 0.0
    %1479 = vmatpush2.msra.mxu0 0.0
    %1480 = vmatprep.subr.mxu0 0.0
    %1481 = vmatpush2.msra.mxu0 0.0
    %1482 = vmatprep.subr.mxu0 0.0
    %1483 = vmatpush2.msra.mxu0 0.0
    %1484 = vmatprep.subr.mxu0 0.0
    %1485 = vmatpush2.msra.mxu0 0.0
    %1486 = vmatprep.subr.mxu0 0.0
    %1487 = vmatpush2.msra.mxu0 0.0
    %1488 = vmatprep.subr.mxu0 0.0
    %1489 = vmatpush2.msra.mxu0 0.0
    %1490 = vmatprep.subr.mxu0 0.0
    %1491 = vmatpush2.msra.mxu0 0.0
    %1492 = vmatprep.subr.mxu0 0.0
    %1493 = vmatpush2.msra.mxu0 0.0
    %1494 = vmatprep.mubr.f32.mxu0 0.0
    %1495 = vmatmul.mubr.f32.gmra.mxu0 %v1428
    %v1496 = vpop.f32.mrf.mxu0
    %v1497 = vadd.f32 0.0, %v1496
    %v1498 = vpop.f32.mrf.mxu0
    %1499 = vdwg.mxu0
    %v1501 = vrot.slane %v1497, 4
    %v1503 = vadd.f32 %v181, %v1501
    %v1504 = vmul.f32 %v1503, 0.5
    %v1505 = vtanh.pop %v1504
    %v1506 = vadd.f32 %v1505, 1.0
    %v1507 = vmul.f32 %v1506, 0.5
    %v1508 = vtanh.pop %v1503
    %v1510 = vrot.slane %v1312, 6
    %v1512 = vmul.f32 %v1507, %v1510
    %1514 = vrot.lane.b32.xlu0 %v1508, 32
    %v1515 = vpop.permute.xlu0 %1514
    %v1517 = vmul.f32 %v1507, %v1515
    %1519 = vrot.lane.b32.xlu0 %v1517, 32
    %v1520 = vpop.permute.xlu0 %1519
    %v1522 = vadd.f32 %v1512, %v1520
    %v1523 = vtanh.pop %v1522
    %1525 = vrot.lane.b32.xlu0 %v1523, 32
    %v1526 = vpop.permute.xlu0 %1525
    %v1528 = vmul.f32 %v1507, %v1526
    %1530 = vrot.lane.b32.xlu0 %v1528, 64
    %v1531 = vpop.permute.xlu0 %1530
    %v1534 = vrot.slane %v1424, 4
    %1535 = vrot.lane.b32.xlu0 %v1534, 96
    %v1536 = vpop.permute.xlu0 %1535
    %v1538 = vsel %vm184, %v1531, %v1536
    %v1540 = vrot.slane %v1538, 4
    %v1541 = vsel %vm290, %v1540, 0
    %1543 = vmatprep.subr.mxu0 0.0
    %1544 = vmatpush1.msra.mxu0 0.0
    %1545 = vmatprep.subr.mxu0 0.0
    %1546 = vmatpush1.msra.mxu0 0.0
    %1547 = vmatprep.subr.mxu0 0.0
    %1548 = vmatpush1.msra.mxu0 0.0
    %1549 = vmatprep.subr.mxu0 0.0
    %1550 = vmatpush1.msra.mxu0 0.0
    %1551 = vmatprep.subr.mxu0 0.0
    %1552 = vmatpush1.msra.mxu0 0.0
    %1553 = vmatprep.subr.mxu0 0.0
    %1554 = vmatpush1.msra.mxu0 0.0
    %1555 = vmatprep.subr.mxu0 0.0
    %1556 = vmatpush1.msra.mxu0 0.0
    %1557 = vmatprep.subr.mxu0 0.0
    %1558 = vmatpush1.msra.mxu0 0.0
    %1559 = vmatprep.subr.mxu0 0.0
    %1560 = vmatpush1.msra.mxu0 %v86
    %1561 = vmatprep.subr.mxu0 0.0
    %1562 = vmatpush1.msra.mxu0 %v85
    %1563 = vmatprep.subr.mxu0 0.0
    %1564 = vmatpush1.msra.mxu0 %v84
    %1565 = vmatprep.subr.mxu0 0.0
    %1566 = vmatpush1.msra.mxu0 %v83
    %1567 = vmatprep.subr.mxu0 0.0
    %1568 = vmatpush1.msra.mxu0 %v82
    %1569 = vmatprep.subr.mxu0 0.0
    %1570 = vmatpush1.msra.mxu0 %v81
    %1571 = vmatprep.subr.mxu0 0.0
    %1572 = vmatpush1.msra.mxu0 %v80
    %1573 = vmatprep.subr.mxu0 0.0
    %1574 = vmatpush1.msra.mxu0 %v79
    %1575 = vmatprep.subr.mxu0 0.0
    %1576 = vmatpush2.msra.mxu0 0.0
    %1577 = vmatprep.subr.mxu0 0.0
    %1578 = vmatpush2.msra.mxu0 0.0
    %1579 = vmatprep.subr.mxu0 0.0
    %1580 = vmatpush2.msra.mxu0 0.0
    %1581 = vmatprep.subr.mxu0 0.0
    %1582 = vmatpush2.msra.mxu0 0.0
    %1583 = vmatprep.subr.mxu0 0.0
    %1584 = vmatpush2.msra.mxu0 0.0
    %1585 = vmatprep.subr.mxu0 0.0
    %1586 = vmatpush2.msra.mxu0 0.0
    %1587 = vmatprep.subr.mxu0 0.0
    %1588 = vmatpush2.msra.mxu0 0.0
    %1589 = vmatprep.subr.mxu0 0.0
    %1590 = vmatpush2.msra.mxu0 0.0
    %1591 = vmatprep.subr.mxu0 0.0
    %1592 = vmatpush2.msra.mxu0 0.0
    %1593 = vmatprep.subr.mxu0 0.0
    %1594 = vmatpush2.msra.mxu0 0.0
    %1595 = vmatprep.subr.mxu0 0.0
    %1596 = vmatpush2.msra.mxu0 0.0
    %1597 = vmatprep.subr.mxu0 0.0
    %1598 = vmatpush2.msra.mxu0 0.0
    %1599 = vmatprep.subr.mxu0 0.0
    %1600 = vmatpush2.msra.mxu0 0.0
    %1601 = vmatprep.subr.mxu0 0.0
    %1602 = vmatpush2.msra.mxu0 0.0
    %1603 = vmatprep.subr.mxu0 0.0
    %1604 = vmatpush2.msra.mxu0 0.0
    %1605 = vmatprep.subr.mxu0 0.0
    %1606 = vmatpush2.msra.mxu0 0.0
    %1607 = vmatprep.mubr.f32.mxu0 0.0
    %1608 = vmatmul.mubr.f32.gmra.mxu0 %v1541
    %v1609 = vpop.f32.mrf.mxu0
    %v1610 = vadd.f32 %v289, %v1609
    %v1611 = vpop.f32.mrf.mxu0
    %1612 = vdwg.mxu0
    %v1613 = vmul.f32 %v1610, 0.5
    %v1614 = vtanh.pop %v1613
    %v1615 = vadd.f32 %v1614, 1.0
    %v1616 = vmul.f32 %v1615, 0.5
    %v1617 = vtanh.pop %v1610
    %v1618 = vmul.f32 %v1616, %v1418
    %1620 = vrot.lane.b32.xlu0 %v1617, 32
    %v1621 = vpop.permute.xlu0 %1620
    %v1623 = vmul.f32 %v1616, %v1621
    %1625 = vrot.lane.b32.xlu0 %v1623, 32
    %v1626 = vpop.permute.xlu0 %1625
    %v1628 = vadd.f32 %v1618, %v1626
    %v1629 = vtanh.pop %v1628
    %1631 = vrot.lane.b32.xlu0 %v1629, 32
    %v1632 = vpop.permute.xlu0 %1631
    %v1634 = vmul.f32 %v1616, %v1632
    %v1635 = vrot.slane %v1528, 4
    %1636 = vrot.lane.b32.xlu0 %v1635, 64
    %v1637 = vpop.permute.xlu0 %1636
    %v1638 = vsel %vm184, %v1637, 0
    %1640 = vmatprep.subr.mxu0 0.0
    %1641 = vmatpush1.msra.mxu0 0.0
    %1642 = vmatprep.subr.mxu0 0.0
    %1643 = vmatpush1.msra.mxu0 0.0
    %1644 = vmatprep.subr.mxu0 0.0
    %1645 = vmatpush1.msra.mxu0 0.0
    %1646 = vmatprep.subr.mxu0 0.0
    %1647 = vmatpush1.msra.mxu0 0.0
    %1648 = vmatprep.subr.mxu0 0.0
    %1649 = vmatpush1.msra.mxu0 0.0
    %1650 = vmatprep.subr.mxu0 0.0
    %1651 = vmatpush1.msra.mxu0 0.0
    %1652 = vmatprep.subr.mxu0 0.0
    %1653 = vmatpush1.msra.mxu0 0.0
    %1654 = vmatprep.subr.mxu0 0.0
    %1655 = vmatpush1.msra.mxu0 0.0
    %1656 = vmatprep.subr.mxu0 0.0
    %1657 = vmatpush1.msra.mxu0 0.0
    %1658 = vmatprep.subr.mxu0 0.0
    %1659 = vmatpush1.msra.mxu0 0.0
    %1660 = vmatprep.subr.mxu0 0.0
    %1661 = vmatpush1.msra.mxu0 0.0
    %1662 = vmatprep.subr.mxu0 0.0
    %1663 = vmatpush1.msra.mxu0 0.0
    %1664 = vmatprep.subr.mxu0 0.0
    %1665 = vmatpush1.msra.mxu0 %v78
    %1666 = vmatprep.subr.mxu0 0.0
    %1667 = vmatpush1.msra.mxu0 %v77
    %1668 = vmatprep.subr.mxu0 0.0
    %1669 = vmatpush1.msra.mxu0 %v76
    %1670 = vmatprep.subr.mxu0 0.0
    %1671 = vmatpush1.msra.mxu0 %v75
    %1672 = vmatprep.subr.mxu0 0.0
    %1673 = vmatpush2.msra.mxu0 0.0
    %1674 = vmatprep.subr.mxu0 0.0
    %1675 = vmatpush2.msra.mxu0 0.0
    %1676 = vmatprep.subr.mxu0 0.0
    %1677 = vmatpush2.msra.mxu0 0.0
    %1678 = vmatprep.subr.mxu0 0.0
    %1679 = vmatpush2.msra.mxu0 0.0
    %1680 = vmatprep.subr.mxu0 0.0
    %1681 = vmatpush2.msra.mxu0 0.0
    %1682 = vmatprep.subr.mxu0 0.0
    %1683 = vmatpush2.msra.mxu0 0.0
    %1684 = vmatprep.subr.mxu0 0.0
    %1685 = vmatpush2.msra.mxu0 0.0
    %1686 = vmatprep.subr.mxu0 0.0
    %1687 = vmatpush2.msra.mxu0 0.0
    %1688 = vmatprep.subr.mxu0 0.0
    %1689 = vmatpush2.msra.mxu0 0.0
    %1690 = vmatprep.subr.mxu0 0.0
    %1691 = vmatpush2.msra.mxu0 0.0
    %1692 = vmatprep.subr.mxu0 0.0
    %1693 = vmatpush2.msra.mxu0 0.0
    %1694 = vmatprep.subr.mxu0 0.0
    %1695 = vmatpush2.msra.mxu0 0.0
    %1696 = vmatprep.subr.mxu0 0.0
    %1697 = vmatpush2.msra.mxu0 0.0
    %1698 = vmatprep.subr.mxu0 0.0
    %1699 = vmatpush2.msra.mxu0 0.0
    %1700 = vmatprep.subr.mxu0 0.0
    %1701 = vmatpush2.msra.mxu0 0.0
    %1702 = vmatprep.subr.mxu0 0.0
    %1703 = vmatpush2.msra.mxu0 0.0
    %1704 = vmatprep.mubr.f32.mxu0 0.0
    %1705 = vmatmul.mubr.f32.gmra.mxu0 %v1638
    %v1706 = vpop.f32.mrf.mxu0
    %v1707 = vadd.f32 0.0, %v1706
    %v1708 = vpop.f32.mrf.mxu0
    %1709 = vdwg.mxu0
    %v1711 = vrot.slane %v1707, 2
    %v1713 = vadd.f32 %v181, %v1711
    %v1714 = vmul.f32 %v1713, 0.5
    %v1715 = vtanh.pop %v1714
    %v1716 = vadd.f32 %v1715, 1.0
    %v1717 = vmul.f32 %v1716, 0.5
    %v1718 = vtanh.pop %v1713
    %v1720 = vrot.slane %v1522, 6
    %v1722 = vmul.f32 %v1717, %v1720
    %1724 = vrot.lane.b32.xlu0 %v1718, 32
    %v1725 = vpop.permute.xlu0 %1724
    %v1727 = vmul.f32 %v1717, %v1725
    %1729 = vrot.lane.b32.xlu0 %v1727, 32
    %v1730 = vpop.permute.xlu0 %1729
    %v1732 = vadd.f32 %v1722, %v1730
    %v1733 = vtanh.pop %v1732
    %1735 = vrot.lane.b32.xlu0 %v1733, 32
    %v1736 = vpop.permute.xlu0 %1735
    %v1738 = vmul.f32 %v1717, %v1736
    %1740 = vrot.lane.b32.xlu0 %v1738, 64
    %v1741 = vpop.permute.xlu0 %1740
    %v1744 = vrot.slane %v1634, 2
    %1745 = vrot.lane.b32.xlu0 %v1744, 96
    %v1746 = vpop.permute.xlu0 %1745
    %v1748 = vsel %vm184, %v1741, %v1746
    %v1750 = vrot.slane %v1748, 6
    %v1751 = vsel %vm290, %v1750, 0
    %1753 = vmatprep.subr.mxu0 0.0
    %1754 = vmatpush1.msra.mxu0 0.0
    %1755 = vmatprep.subr.mxu0 0.0
    %1756 = vmatpush1.msra.mxu0 0.0
    %1757 = vmatprep.subr.mxu0 0.0
    %1758 = vmatpush1.msra.mxu0 0.0
    %1759 = vmatprep.subr.mxu0 0.0
    %1760 = vmatpush1.msra.mxu0 0.0
    %1761 = vmatprep.subr.mxu0 0.0
    %1762 = vmatpush1.msra.mxu0 0.0
    %1763 = vmatprep.subr.mxu0 0.0
    %1764 = vmatpush1.msra.mxu0 0.0
    %1765 = vmatprep.subr.mxu0 0.0
    %1766 = vmatpush1.msra.mxu0 0.0
    %1767 = vmatprep.subr.mxu0 0.0
    %1768 = vmatpush1.msra.mxu0 0.0
    %1769 = vmatprep.subr.mxu0 0.0
    %1770 = vmatpush1.msra.mxu0 %v86
    %1771 = vmatprep.subr.mxu0 0.0
    %1772 = vmatpush1.msra.mxu0 %v85
    %1773 = vmatprep.subr.mxu0 0.0
    %1774 = vmatpush1.msra.mxu0 %v84
    %1775 = vmatprep.subr.mxu0 0.0
    %1776 = vmatpush1.msra.mxu0 %v83
    %1777 = vmatprep.subr.mxu0 0.0
    %1778 = vmatpush1.msra.mxu0 %v82
    %1779 = vmatprep.subr.mxu0 0.0
    %1780 = vmatpush1.msra.mxu0 %v81
    %1781 = vmatprep.subr.mxu0 0.0
    %1782 = vmatpush1.msra.mxu0 %v80
    %1783 = vmatprep.subr.mxu0 0.0
    %1784 = vmatpush1.msra.mxu0 %v79
    %1785 = vmatprep.subr.mxu0 0.0
    %1786 = vmatpush2.msra.mxu0 0.0
    %1787 = vmatprep.subr.mxu0 0.0
    %1788 = vmatpush2.msra.mxu0 0.0
    %1789 = vmatprep.subr.mxu0 0.0
    %1790 = vmatpush2.msra.mxu0 0.0
    %1791 = vmatprep.subr.mxu0 0.0
    %1792 = vmatpush2.msra.mxu0 0.0
    %1793 = vmatprep.subr.mxu0 0.0
    %1794 = vmatpush2.msra.mxu0 0.0
    %1795 = vmatprep.subr.mxu0 0.0
    %1796 = vmatpush2.msra.mxu0 0.0
    %1797 = vmatprep.subr.mxu0 0.0
    %1798 = vmatpush2.msra.mxu0 0.0
    %1799 = vmatprep.subr.mxu0 0.0
    %1800 = vmatpush2.msra.mxu0 0.0
    %1801 = vmatprep.subr.mxu0 0.0
    %1802 = vmatpush2.msra.mxu0 0.0
    %1803 = vmatprep.subr.mxu0 0.0
    %1804 = vmatpush2.msra.mxu0 0.0
    %1805 = vmatprep.subr.mxu0 0.0
    %1806 = vmatpush2.msra.mxu0 0.0
    %1807 = vmatprep.subr.mxu0 0.0
    %1808 = vmatpush2.msra.mxu0 0.0
    %1809 = vmatprep.subr.mxu0 0.0
    %1810 = vmatpush2.msra.mxu0 0.0
    %1811 = vmatprep.subr.mxu0 0.0
    %1812 = vmatpush2.msra.mxu0 0.0
    %1813 = vmatprep.subr.mxu0 0.0
    %1814 = vmatpush2.msra.mxu0 0.0
    %1815 = vmatprep.subr.mxu0 0.0
    %1816 = vmatpush2.msra.mxu0 0.0
    %1817 = vmatprep.mubr.f32.mxu0 0.0
    %1818 = vmatmul.mubr.f32.gmra.mxu0 %v1751
    %v1819 = vpop.f32.mrf.mxu0
    %v1820 = vadd.f32 %v289, %v1819
    %v1821 = vpop.f32.mrf.mxu0
    %1822 = vdwg.mxu0
    %v1823 = vmul.f32 %v1820, 0.5
    %v1824 = vtanh.pop %v1823
    %v1825 = vadd.f32 %v1824, 1.0
    %v1826 = vmul.f32 %v1825, 0.5
    %v1827 = vtanh.pop %v1820
    %v1828 = vmul.f32 %v1826, %v1628
    %1830 = vrot.lane.b32.xlu0 %v1827, 32
    %v1831 = vpop.permute.xlu0 %1830
    %v1833 = vmul.f32 %v1826, %v1831
    %1835 = vrot.lane.b32.xlu0 %v1833, 32
    %v1836 = vpop.permute.xlu0 %1835
    %v1838 = vadd.f32 %v1828, %v1836
    %v1839 = vtanh.pop %v1838
    %1841 = vrot.lane.b32.xlu0 %v1839, 32
    %v1842 = vpop.permute.xlu0 %1841
    %v1844 = vmul.f32 %v1826, %v1842
    %v1845 = vsub.f32 1.0, %v1717
    %v1846 = vmul.f32 %v1717, %v1845
    %v1847 = vlaneseq
    %v1848 = vshrl.u32 %v1847, 7
    %v1849 = vsub.s32 3, %v1848
    %v1850 = vrot.slane %v74, %v1849
    %v1851 = vmul.f32 %v1846, %v1850
    %v1852 = vmul.f32 %v1718, %v1718
    %v1853 = vsub.f32 1.0, %v1852
    %v1854 = vmul.f32 %v1853, %v1850
    %v1855 = vmul.f32 %v1851, %v1720
    %v1856 = vmul.f32 %v1851, %v1725
    %1858 = vrot.lane.b32.xlu0 %v1856, 32
    %v1859 = vpop.permute.xlu0 %1858
    %v1861 = vadd.f32 %v1855, %v1859
    %1863 = vrot.lane.b32.xlu0 %v1854, 32
    %v1864 = vpop.permute.xlu0 %1863
    %v1866 = vmul.f32 %v1717, %v1864
    %1868 = vrot.lane.b32.xlu0 %v1866, 32
    %v1869 = vpop.permute.xlu0 %1868
    %v1871 = vadd.f32 %v1861, %v1869
    %v1872 = vmul.f32 %v1851, %v1736
    %v1873 = vmul.f32 %v1733, %v1733
    %v1874 = vsub.f32 1.0, %v1873
    %1876 = vrot.lane.b32.xlu0 %v1874, 32
    %v1877 = vpop.permute.xlu0 %1876
    %v1879 = vmul.f32 %v1717, %v1877
    %1881 = vrot.lane.b32.xlu0 %v1871, 32
    %v1882 = vpop.permute.xlu0 %1881
    %v1884 = vmul.f32 %v1879, %v1882
    %v1885 = vadd.f32 %v1872, %v1884
    %v1887 = vrot.slane %v1885, 6
    %1888 = vrot.lane.b32.xlu0 %v1887, 64
    %v1889 = vpop.permute.xlu0 %1888
    %v1890 = vsel %vm184, %v1889, 0
    %1892 = vmatprep.subr.mxu0 0.0
    %1893 = vmatpush1.msra.mxu0 0.0
    %1894 = vmatprep.subr.mxu0 0.0
    %1895 = vmatpush1.msra.mxu0 0.0
    %1896 = vmatprep.subr.mxu0 0.0
    %1897 = vmatpush1.msra.mxu0 0.0
    %1898 = vmatprep.subr.mxu0 0.0
    %1899 = vmatpush1.msra.mxu0 0.0
    %1900 = vmatprep.subr.mxu0 0.0
    %1901 = vmatpush1.msra.mxu0 0.0
    %1902 = vmatprep.subr.mxu0 0.0
    %1903 = vmatpush1.msra.mxu0 0.0
    %1904 = vmatprep.subr.mxu0 0.0
    %1905 = vmatpush1.msra.mxu0 0.0
    %1906 = vmatprep.subr.mxu0 0.0
    %1907 = vmatpush1.msra.mxu0 0.0
    %1908 = vmatprep.subr.mxu0 0.0
    %1909 = vmatpush1.msra.mxu0 0.0
    %1910 = vmatprep.subr.mxu0 0.0
    %1911 = vmatpush1.msra.mxu0 0.0
    %1912 = vmatprep.subr.mxu0 0.0
    %1913 = vmatpush1.msra.mxu0 0.0
    %1914 = vmatprep.subr.mxu0 0.0
    %1915 = vmatpush1.msra.mxu0 0.0
    %1916 = vmatprep.subr.mxu0 0.0
    %1917 = vmatpush1.msra.mxu0 %v82
    %1918 = vmatprep.subr.mxu0 0.0
    %1919 = vmatpush1.msra.mxu0 %v81
    %1920 = vmatprep.subr.mxu0 0.0
    %1921 = vmatpush1.msra.mxu0 %v80
    %1922 = vmatprep.subr.mxu0 0.0
    %1923 = vmatpush1.msra.mxu0 %v79
    %1924 = vmatprep.subr.mxu0 0.0
    %1925 = vmatpush2.msra.mxu0 0.0
    %1926 = vmatprep.subr.mxu0 0.0
    %1927 = vmatpush2.msra.mxu0 0.0
    %1928 = vmatprep.subr.mxu0 0.0
    %1929 = vmatpush2.msra.mxu0 0.0
    %1930 = vmatprep.subr.mxu0 0.0
    %1931 = vmatpush2.msra.mxu0 0.0
    %1932 = vmatprep.subr.mxu0 0.0
    %1933 = vmatpush2.msra.mxu0 0.0
    %1934 = vmatprep.subr.mxu0 0.0
    %1935 = vmatpush2.msra.mxu0 0.0
    %1936 = vmatprep.subr.mxu0 0.0
    %1937 = vmatpush2.msra.mxu0 0.0
    %1938 = vmatprep.subr.mxu0 0.0
    %1939 = vmatpush2.msra.mxu0 0.0
    %1940 = vmatprep.subr.mxu0 0.0
    %1941 = vmatpush2.msra.mxu0 0.0
    %1942 = vmatprep.subr.mxu0 0.0
    %1943 = vmatpush2.msra.mxu0 0.0
    %1944 = vmatprep.subr.mxu0 0.0
    %1945 = vmatpush2.msra.mxu0 0.0
    %1946 = vmatprep.subr.mxu0 0.0
    %1947 = vmatpush2.msra.mxu0 0.0
    %1948 = vmatprep.subr.mxu0 0.0
    %1949 = vmatpush2.msra.mxu0 0.0
    %1950 = vmatprep.subr.mxu0 0.0
    %1951 = vmatpush2.msra.mxu0 0.0
    %1952 = vmatprep.subr.mxu0 0.0
    %1953 = vmatpush2.msra.mxu0 0.0
    %1954 = vmatprep.subr.mxu0 0.0
    %1955 = vmatpush2.msra.mxu0 0.0
    %1956 = vmatprep.mubr.f32.mxu0 0.0
    %1957 = vmatmul.mubr.f32.gmra.mxu0 %v1890
    %v1958 = vpop.f32.mrf.mxu0
    %v1959 = vadd.f32 0.0, %v1958
    %v1960 = vpop.f32.mrf.mxu0
    %1961 = vdwg.mxu0
    %v1962 = vsub.f32 1.0, %v1826
    %v1963 = vmul.f32 %v1826, %v1962
    %v1964 = vmul.f32 %v1963, %v1959
    %v1965 = vmul.f32 %v1827, %v1827
    %v1966 = vsub.f32 1.0, %v1965
    %v1967 = vmul.f32 %v1966, %v1959
    %v1968 = vmul.f32 %v1964, %v1628
    %v1969 = vmul.f32 %v1964, %v1831
    %1971 = vrot.lane.b32.xlu0 %v1969, 32
    %v1972 = vpop.permute.xlu0 %1971
    %v1974 = vadd.f32 %v1968, %v1972
    %1976 = vrot.lane.b32.xlu0 %v1967, 32
    %v1977 = vpop.permute.xlu0 %1976
    %v1979 = vmul.f32 %v1826, %v1977
    %1981 = vrot.lane.b32.xlu0 %v1979, 32
    %v1982 = vpop.permute.xlu0 %1981
    %v1984 = vadd.f32 %v1974, %v1982
    %v1985 = vmul.f32 %v1964, %v1842
    %v1986 = vmul.f32 %v1839, %v1839
    %v1987 = vsub.f32 1.0, %v1986
    %1989 = vrot.lane.b32.xlu0 %v1987, 32
    %v1990 = vpop.permute.xlu0 %1989
    %v1992 = vmul.f32 %v1826, %v1990
    %1994 = vrot.lane.b32.xlu0 %v1984, 32
    %v1995 = vpop.permute.xlu0 %1994
    %v1997 = vmul.f32 %v1992, %v1995
    %v1998 = vadd.f32 %v1985, %v1997
    %v1999 = vlaneseq
    %v2000 = vshrl.u32 %v1999, 7
    %v2001 = vsub.s32 2, %v2000
    %v2002 = vrot.slane %v87, %v2001
    %2004 = vrot.lane.b32.xlu0 %v2002, 64
    %v2005 = vpop.permute.xlu0 %2004
    %v2007 = vmul.f32 %v1998, %v2005
    %2009 = vrot.lane.b32.xlu0 %v2007, 64
    %v2010 = vpop.permute.xlu0 %2009
    %vm2012 = vcmask 254976
    %v2013 = vsel %vm2012, %v2010, 0.0
    %2014 = vadd.xlane.f32.xlu0 %v2013
    %v2015 = vpop.xlane.xlu0 %2014
    %v2016 = vmul.f32 %v1844, %v2005
    %2018 = vrot.lane.b32.xlu0 %v2016, 64
    %v2019 = vpop.permute.xlu0 %2018
    %v2021 = vsel %vm2012, %v2019, 0.0
    %2022 = vadd.xlane.f32.xlu0 %v2021
    %v2023 = vpop.xlane.xlu0 %2022
    %v2024 = vstv %s88
    %v2025 = vadd.f32 %v2023, %v2024
    %v2026 = vmul.f32 %v2025, %v2002
    %2027 = vrot.lane.b32.xlu0 %v2002, 96
    %v2028 = vpop.permute.xlu0 %2027
    %v2030 = vadd.f32 %v2026, %v2028
    %v2031 = vmul.f32 %v2030, %v2005
    %2033 = vrot.lane.b32.xlu0 %v2031, 96
    %v2034 = vpop.permute.xlu0 %2033
    %v2036 = vsel %vm2012, %v2034, 0.0
    %2037 = vadd.xlane.f32.xlu0 %v2036
    %v2038 = vpop.xlane.xlu0 %2037
    %v2039 = vstv %s89
    %v2040 = vadd.f32 %v2038, %v2039
    %v2041 = vld [vmem:[%s5] sm:$0x3]
    %v2042 = vld [vmem:[%s6] sm:$0xff]
    %v2043 = vld [vmem:[%s6 + $0x8] sm:$0xff]
    %vm2044 = vcmask 130048
    %v2046 = vsel %vm2044, %v2041, 0
    %2048 = vmatprep.subr.mxu0 0.0
    %2049 = vmatpush1.msra.mxu0 0.0
    %2050 = vmatprep.subr.mxu0 0.0
    %2051 = vmatpush1.msra.mxu0 0.0
    %2052 = vmatprep.subr.mxu0 0.0
    %2053 = vmatpush1.msra.mxu0 0.0
    %2054 = vmatprep.subr.mxu0 0.0
    %2055 = vmatpush1.msra.mxu0 0.0
    %2056 = vmatprep.subr.mxu0 0.0
    %2057 = vmatpush1.msra.mxu0 0.0
    %2058 = vmatprep.subr.mxu0 0.0
    %2059 = vmatpush1.msra.mxu0 0.0
    %2060 = vmatprep.subr.mxu0 0.0
    %2061 = vmatpush1.msra.mxu0 0.0
    %2062 = vmatprep.subr.mxu0 0.0
    %2063 = vmatpush1.msra.mxu0 0.0
    %2064 = vmatprep.subr.mxu0 0.0
    %2065 = vmatpush1.msra.mxu0 0.0
    %2066 = vmatprep.subr.mxu0 0.0
    %2067 = vmatpush1.msra.mxu0 0.0
    %2068 = vmatprep.subr.mxu0 0.0
    %2069 = vmatpush1.msra.mxu0 0.0
    %2070 = vmatprep.subr.mxu0 0.0
    %2071 = vmatpush1.msra.mxu0 0.0
    %2072 = vmatprep.subr.mxu0 0.0
    %2073 = vmatpush1.msra.mxu0 0.0
    %2074 = vmatprep.subr.mxu0 0.0
    %2075 = vmatpush1.msra.mxu0 0.0
    %2076 = vmatprep.subr.mxu0 0.0
    %2077 = vmatpush1.msra.mxu0 %v2043
    %2078 = vmatprep.subr.mxu0 0.0
    %2079 = vmatpush1.msra.mxu0 %v2042
    %2080 = vmatprep.subr.mxu0 0.0
    %2081 = vmatpush2.msra.mxu0 0.0
    %2082 = vmatprep.subr.mxu0 0.0
    %2083 = vmatpush2.msra.mxu0 0.0
    %2084 = vmatprep.subr.mxu0 0.0
    %2085 = vmatpush2.msra.mxu0 0.0
    %2086 = vmatprep.subr.mxu0 0.0
    %2087 = vmatpush2.msra.mxu0 0.0
    %2088 = vmatprep.subr.mxu0 0.0
    %2089 = vmatpush2.msra.mxu0 0.0
    %2090 = vmatprep.subr.mxu0 0.0
    %2091 = vmatpush2.msra.mxu0 0.0
    %2092 = vmatprep.subr.mxu0 0.0
    %2093 = vmatpush2.msra.mxu0 0.0
    %2094 = vmatprep.subr.mxu0 0.0
    %2095 = vmatpush2.msra.mxu0 0.0
    %2096 = vmatprep.subr.mxu0 0.0
    %2097 = vmatpush2.msra.mxu0 0.0
    %2098 = vmatprep.subr.mxu0 0.0
    %2099 = vmatpush2.msra.mxu0 0.0
    %2100 = vmatprep.subr.mxu0 0.0
    %2101 = vmatpush2.msra.mxu0 0.0
    %2102 = vmatprep.subr.mxu0 0.0
    %2103 = vmatpush2.msra.mxu0 0.0
    %2104 = vmatprep.subr.mxu0 0.0
    %2105 = vmatpush2.msra.mxu0 0.0
    %2106 = vmatprep.subr.mxu0 0.0
    %2107 = vmatpush2.msra.mxu0 0.0
    %2108 = vmatprep.subr.mxu0 0.0
    %2109 = vmatpush2.msra.mxu0 0.0
    %2110 = vmatprep.subr.mxu0 0.0
    %2111 = vmatpush2.msra.mxu0 0.0
    %2112 = vmatprep.mubr.f32.mxu0 0.0
    %2113 = vmatmul.mubr.f32.gmra.mxu0 %v2046
    %v2114 = vpop.f32.mrf.mxu0
    %v2115 = vadd.f32 0.0, %v2114
    %v2116 = vpop.f32.mrf.mxu0
    %2117 = vdwg.mxu0
    %v2118 = vsub.f32 %v2041, %v2115
    %v2119 = vlaneseq
    %v2120 = vshrl.u32 %v2119, 7
    %v2121 = vsub.s32 3, %v2120
    %v2122 = vrot.slane %v87, %v2121
    %2124 = vrot.lane.b32.xlu0 %v2122, 8
    %v2125 = vpop.permute.xlu0 %2124
    %v2127 = vmul.f32 %v2118, %v2125
    %v2128 = vadd.f32 %v2127, %v2122
    %v2129 = vrsqrt.pop %v2128
    %v2130 = vmul.f32 %v2128, %v2129
    %vm2131 = vcmp.eq.f32.partialorder %v2128, inf
    %v2132 = vsel %vm2131, %v2128, %v2130
    %vm2133 = vcmp.eq.f32.partialorder %v2128, 0.0
    %v2134 = vand.u32 %v2128, 2147483648
    %v2135 = vsel %vm2133, %v2134, %v2132
    %s2136 = smul.f32 %s90, %s91
    %v2137 = vstv %s2136
    %v2138 = vrcp.pop %v2137
    %s2139 = vtos %v2138
    %v2140 = vstv %s91
    %v2141 = vrcp.pop %v2140
    %s2142 = vtos %v2141
    %v2143 = vstv %s2142
    %v2144 = vmul.f32 %v2041, %v2143
    %v2145 = vstv %s2139
    %v2146 = vmul.f32 %v2041, %v2145
    %2148 = vrot.lane.b32.xlu0 %v2146, 16
    %v2149 = vpop.permute.xlu0 %2148
    %v2151 = vsub.f32 %v2144, %v2149
    %2153 = vrot.lane.b32.xlu0 %v2151, 120
    %v2154 = vpop.permute.xlu0 %2153
    %v2156 = vmul.f32 %v2135, %v2154
    %2158 = vrot.lane.b32.xlu0 %v2115, 8
    %v2159 = vpop.permute.xlu0 %2158
    %v2161 = vsub.f32 %v2156, %v2159
    %2163 = vrot.lane.b32.xlu0 %v2161, 120
    %v2164 = vpop.permute.xlu0 %2163
    %vm2166 = vcmask 58368
    %2167 = vst.msk [vmem:[#allocation9] sm:$0x3] %vm2166, %v2164
    %vm2168 = vcmask 1024
    %2169 = vst.msk [vmem:[#allocation10] sm:$0x3] %vm2168, %v2025
    %vm2170 = vcmask 9224
    %2171 = vst.msk [vmem:[#allocation10] sm:$0x3] %vm2170, %v2015
    %vm2172 = vcmask 17424
    %2173 = vst.msk [vmem:[#allocation10] sm:$0x3] %vm2172, %v2040
    // Predicated region
    $region46: #{tpu_custom_call.1} parent=1 // pred_check
      _
    $region47: #{tpu_custom_call.1} parent=1 // pred_check_branch
      %2175 = sbr.rel (0) target = $region49
    $region48: #{tpu_custom_call.1} parent=1 // pred_region
      %s2177 = ssub.s32 32, 32
      %2178 = vsyncadd [#allocation4], %s2177
      %s2180 = sshll.u32 [#allocation9], 4
      %s2181 = int_to_ptr.vmem [resolvable:$true] %s2180
      %2183 = dma.vmem_to_hbm [thread:$0]  %s2181, 32, %s8, [#allocation4]
    $region49: #{tpu_custom_call.1} parent=1 // pred_fallthru
      _
    // Predicated region
    $region50: #{tpu_custom_call.1} parent=1 // pred_check
      _
    $region51: #{tpu_custom_call.1} parent=1 // pred_check_branch
      %2185 = sbr.rel (0) target = $region53
    $region52: #{tpu_custom_call.1} parent=1 // pred_region
      %s2187 = ssub.s32 32, 32
      %2188 = vsyncadd [#allocation11], %s2187
      %s2190 = sshll.u32 [#allocation10], 4
      %s2191 = int_to_ptr.vmem [resolvable:$true] %s2190
      %2193 = dma.vmem_to_hbm [thread:$0]  %s2191, 32, %s9, [#allocation11]
    $region53: #{tpu_custom_call.1} parent=1 // pred_fallthru
      _
    // Predicated region
    $region54: #{tpu_custom_call.1} parent=1 // pred_check
      _
    $region55: #{tpu_custom_call.1} parent=1 // pred_check_branch
      %2195 = sbr.rel (0) target = $region57
    $region56: #{tpu_custom_call.1} parent=1 // pred_region
      %2196 = dma.done [#allocation4], 32
    $region57: #{tpu_custom_call.1} parent=1 // pred_fallthru
      _
    // Predicated region
    $region58: #{tpu_custom_call.1} parent=1 // pred_check
      _
    $region59: #{tpu_custom_call.1} parent=1 // pred_check_branch
      %2198 = sbr.rel (0) target = $region61
    $region60: #{tpu_custom_call.1} parent=1 // pred_region
      %2199 = dma.done [#allocation11], 32
    $region61: #{tpu_custom_call.1} parent=1 // pred_fallthru
      _
    %2200 = vsyncpa [#allocation3], 1
    %2201 = vsyncpa [#allocation7], 1
    %2202 = vsyncpa [#allocation4], 1
    %2203 = vsyncpa [#allocation11], 1
    %2204 = vsyncpa [#allocation5], 1

</llo_original>
